<compile_context>
chip_gen: v5e
topology: v5e:2x2
jax: 0.10.0
libtpu: 0.0.40
codegen_flags: <defaults>
</compile_context>

<pallas_src>
import functools

import jax
import jax.numpy as jnp
from jax.experimental import pallas as pl
from jax.experimental.pallas import tpu as pltpu


def _layernorm(x, gamma, beta, eps=1e-5):
    mu = jnp.mean(x, axis=-1, keepdims=True)
    var = jnp.mean((x - mu) ** 2, axis=-1, keepdims=True)
    return (x - mu) * jax.lax.rsqrt(var + eps) * gamma + beta


def transformer_lsa_kernel(x_ref, wqkv_ref, bqkv_ref, wo_ref,
                           w1_ref, w2_ref, w3_ref,
                           vec_e_ref, vec_h_ref,
                           o_ref, *, num_heads, seq_len):
    # x block: (BB*S, E) rows covering BB whole batch elements.
    R, E = x_ref.shape
    S = seq_len
    BB = R // S
    hd = E // num_heads

    x = x_ref[...]                                           # (R, E) f32

    # ---- fused QKV projection (one MXU pass, N = 3E) ----------------------
    # 1/temperature and 1/sqrt(hd) are already folded into the wq/bq columns.
    qkv = jnp.dot(x, wqkv_ref[...],
                  preferred_element_type=jnp.float32) + bqkv_ref[...]
    q = qkv[:, :E]
    k = qkv[:, E:2 * E]
    v = qkv[:, 2 * E:]

    # ---- attention with a fused (BB*num_heads) batch axis -----------------
    def to_heads(t):                                         # (R, E) -> (BB*H, S, hd)
        t = t.reshape(BB, S, num_heads, hd)
        return jnp.transpose(t, (0, 2, 1, 3)).reshape(BB * num_heads, S, hd)

    q3 = to_heads(q)
    k3 = to_heads(k)
    v3 = to_heads(v)

    scores = jax.lax.dot_general(                            # (BB*H, S, S)
        q3, k3, (((2,), (2,)), ((0,), (0,))),
        preferred_element_type=jnp.float32)

    # attn_mask = eye(S) (bool): True on the diagonal => self-attention
    # disallowed.  Large finite negative avoids inf arithmetic in max/exp.
    row = jax.lax.broadcasted_iota(jnp.int32, (S, S), 0)
    col = jax.lax.broadcasted_iota(jnp.int32, (S, S), 1)
    scores = jnp.where((row == col)[None, :, :], jnp.float32(-1e30), scores)

    # numerically-stable softmax; denominator via EUP reciprocal (not VPU div)
    scores = scores - jnp.max(scores, axis=-1, keepdims=True)
    p = jnp.exp(scores)
    p = p * pl.reciprocal(jnp.sum(p, axis=-1, keepdims=True), approx=True)

    ctx = jax.lax.dot_general(                               # (BB*H, S, hd)
        p, v3, (((2,), (1,)), ((0,), (0,))),
        preferred_element_type=jnp.float32)
    ctx = ctx.reshape(BB, num_heads, S, hd)
    ctx = jnp.transpose(ctx, (0, 2, 1, 3)).reshape(R, E)

    attn_out = jnp.dot(ctx, wo_ref[...],
                       preferred_element_type=jnp.float32) + vec_e_ref[0:1, :]

    # ---- residual + LayerNorm 1 -------------------------------------------
    h = _layernorm(x + attn_out, vec_e_ref[1:2, :], vec_e_ref[2:3, :])

    # ---- FeedForward: Lin->GELU->Lin->GELU->Lin->Identity (regression) -----
    f = jnp.dot(h, w1_ref[...], preferred_element_type=jnp.float32) + vec_h_ref[0:1, :]
    f = jax.nn.gelu(f, approximate=True)
    f = jnp.dot(f, w2_ref[...], preferred_element_type=jnp.float32) + vec_h_ref[1:2, :]
    f = jax.nn.gelu(f, approximate=True)
    f = jnp.dot(f, w3_ref[...], preferred_element_type=jnp.float32) + vec_e_ref[3:4, :]

    # ---- residual + LayerNorm 2 (final dropout is a no-op at p=0.0) --------
    o_ref[...] = _layernorm(h + f, vec_e_ref[4:5, :], vec_e_ref[5:6, :])


def pack_params(params, num_heads):
    """Wrapper-side (tiny, one-off) packing: fuse QKV and the small vectors."""
    E = params['wq'].shape[0]
    hd = E // num_heads
    scale = 1.0 / jnp.sqrt(jnp.float32(hd))
    inv_temp = 1.0 / params['temperature'][0, 0]
    # Linear(x/t) = x @ (wq/t) + bq; the extra 1/sqrt(hd) softmax scale is also
    # folded here (q and bq both scaled).
    wq_eff = params['wq'] * (scale * inv_temp)
    bq_eff = params['bq'] * scale
    return {
        'w_qkv': jnp.concatenate([wq_eff, params['wk'], params['wv']], axis=1),   # (E, 3E)
        'b_qkv': jnp.concatenate([bq_eff, params['bk'], params['bv']], axis=1),   # (1, 3E)
        'wo': params['wo'],
        'w1': params['w1'], 'w2': params['w2'], 'w3': params['w3'],
        # rows: 0=bo, 1=ln1_w, 2=ln1_b, 3=b3, 4=ln2_w, 5=ln2_b
        'vec_e': jnp.concatenate([params['bo'], params['ln1_w'], params['ln1_b'],
                                  params['b3'], params['ln2_w'], params['ln2_b']],
                                 axis=0),                                         # (6, E)
        # rows: 0=b1, 1=b2
        'vec_h': jnp.concatenate([params['b1'], params['b2']], axis=0),           # (2, H)
    }


def transformer_lsa_block(x, packed, num_heads, *, batch_block=None):
    B, S, E = x.shape
    H = packed['w1'].shape[1]

    # Batch several elements per grid step so each step works on ~512 rows
    # (amortizes per-step pipeline overhead, fills MXU M).  With S=8 the row
    # count per block is always a multiple of 8 (sublane-aligned).
    if batch_block is None:
        batch_block = max(1, min(B, max(1, 512 // S)))
    BB = batch_block
    Bp = -(-B // BB) * BB
    if Bp != B:
        x = jnp.pad(x, ((0, Bp - B), (0, 0), (0, 0)))
    x_rows = x.reshape(Bp * S, E)
    rows = BB * S

    def full(shape):
        return pl.BlockSpec(shape, lambda i: (0,) * len(shape))

    kernel = functools.partial(transformer_lsa_kernel,
                               num_heads=num_heads, seq_len=S)

    # NOTE: weights stay fully resident in VMEM; at realistic E/H on v7x
    # (64 MiB VMEM) the FF weights would need K/N tiling + bf16 operands.
    out_rows = pl.pallas_call(
        kernel,
        out_shape=jax.ShapeDtypeStruct((Bp * S, E), jnp.float32),
        grid_spec=pltpu.PrefetchScalarGridSpec(
            num_scalar_prefetch=0,
            grid=(Bp // BB,),
            in_specs=[
                pl.BlockSpec((rows, E), lambda i: (i, 0)),   # x row slab
                full((E, 3 * E)), full((1, 3 * E)),          # fused QKV w, b
                full((E, E)),                                # wo
                full((E, H)), full((H, H)), full((H, E)),    # FF weights
                full((6, E)), full((2, H)),                  # packed vectors
            ],
            out_specs=pl.BlockSpec((rows, E), lambda i: (i, 0)),
        ),
        compiler_params=pltpu.CompilerParams(
            dimension_semantics=("parallel",)),              # batch axis is independent
    )(x_rows, packed['w_qkv'], packed['b_qkv'], packed['wo'],
      packed['w1'], packed['w2'], packed['w3'],
      packed['vec_e'], packed['vec_h'])

    return out_rows.reshape(Bp, S, E)[:B]


# ----- pure-JAX reference (original unpacked math) for a correctness check ---
def reference(x, p, num_heads):
    B, S, E = x.shape
    hd = E // num_heads
    q_in = x / p['temperature'][0, 0]
    q = q_in @ p['wq'] + p['bq'][0]
    k = x @ p['wk'] + p['bk'][0]
    v = x @ p['wv'] + p['bv'][0]
    q = q.reshape(B, S, num_heads, hd)
    k = k.reshape(B, S, num_heads, hd)
    v = v.reshape(B, S, num_heads, hd)
    scores = jnp.einsum('bqhd,bkhd->bhqk', q, k) / jnp.sqrt(jnp.float32(hd))
    diag = jnp.eye(S, dtype=bool)
    scores = jnp.where(diag[None, None], -jnp.inf, scores)
    attn = jax.nn.softmax(scores, axis=-1)
    ctx = jnp.einsum('bhqk,bkhd->bqhd', attn, v).reshape(B, S, E)
    attn_out = ctx @ p['wo'] + p['bo'][0]

    def ln(z, g, b, eps=1e-5):
        mu = z.mean(-1, keepdims=True)
        var = ((z - mu) ** 2).mean(-1, keepdims=True)
        return (z - mu) * jax.lax.rsqrt(var + eps) * g[0] + b[0]

    h = ln(x + attn_out, p['ln1_w'], p['ln1_b'])
    f = jax.nn.gelu(h @ p['w1'] + p['b1'][0], approximate=True)
    f = jax.nn.gelu(f @ p['w2'] + p['b2'][0], approximate=True)
    f = f @ p['w3'] + p['b3'][0]
    return ln(h + f, p['ln2_w'], p['ln2_b'])


if __name__ == "__main__":
    # small shapes consistent with the module
    B, num_patches, E, num_heads, H = 2, 7, 32, 4, 64
    S = 1 + num_patches

    key = jax.random.PRNGKey(0)
    ks = jax.random.split(key, 16)
    f32 = jnp.float32
    scale = 0.05

    params = {
        'temperature': jnp.ones((1, 1), f32),                # nn.Parameter(torch.ones(1))
        'wq': scale * jax.random.normal(ks[0], (E, E), f32),
        'bq': scale * jax.random.normal(ks[1], (1, E), f32),
        'wk': scale * jax.random.normal(ks[2], (E, E), f32),
        'bk': scale * jax.random.normal(ks[3], (1, E), f32),
        'wv': scale * jax.random.normal(ks[4], (E, E), f32),
        'bv': scale * jax.random.normal(ks[5], (1, E), f32),
        'wo': scale * jax.random.normal(ks[6], (E, E), f32),
        'bo': scale * jax.random.normal(ks[7], (1, E), f32),
        'ln1_w': jnp.ones((1, E), f32), 'ln1_b': jnp.zeros((1, E), f32),
        'w1': scale * jax.random.normal(ks[8], (E, H), f32),
        'b1': scale * jax.random.normal(ks[9], (1, H), f32),
        'w2': scale * jax.random.normal(ks[10], (H, H), f32),
        'b2': scale * jax.random.normal(ks[11], (1, H), f32),
        'w3': scale * jax.random.normal(ks[12], (H, E), f32),
        'b3': scale * jax.random.normal(ks[13], (1, E), f32),
        'ln2_w': jnp.ones((1, E), f32), 'ln2_b': jnp.zeros((1, E), f32),
    }

    x = jax.random.normal(ks[14], (B, S, E), f32)   # "key" input tensor

    packed = pack_params(params, num_heads)
    out = transformer_lsa_block(x, packed, num_heads)
    out = jax.block_until_ready(out)

    ref = reference(x, params, num_heads)
    assert out.shape == (B, S, E)
    # Tolerance covers the approximate EUP reciprocal in the softmax
    # denominator (~1e-4-level after the final LayerNorm); real bugs (mask,
    # head layout, LN/FF order) produce O(0.1-1) errors.
    assert jnp.allclose(out, ref, atol=1e-3, rtol=1e-3), "mismatch vs reference"

    print("KERNEL_OK")
</pallas_src>

<mosaic_0001>
module attributes {stable_mosaic.version = 11 : i64} {
  func.func @transformer_lsa_kernel(%arg0: i32, %arg1: memref<16x32xf32, #tpu.memory_space<vmem>>, %arg2: memref<32x96xf32, #tpu.memory_space<vmem>>, %arg3: memref<1x96xf32, #tpu.memory_space<vmem>>, %arg4: memref<32x32xf32, #tpu.memory_space<vmem>>, %arg5: memref<32x64xf32, #tpu.memory_space<vmem>>, %arg6: memref<64x64xf32, #tpu.memory_space<vmem>>, %arg7: memref<64x32xf32, #tpu.memory_space<vmem>>, %arg8: memref<6x32xf32, #tpu.memory_space<vmem>>, %arg9: memref<2x64xf32, #tpu.memory_space<vmem>>, %arg10: memref<16x32xf32, #tpu.memory_space<vmem>>) attributes {dimension_semantics = [#tpu.dimension_semantics<parallel>], iteration_bounds = array<i64: 1>, scalar_prefetch = 0 : i64, scratch_operands = 0 : i64, tpu.core_type = #tpu.core_type<tc>, window_params = [{transform_indices = @transform_0, window_bounds = array<i64: 16, 32>}, {pipeline_mode = #tpu.pipeline_mode<synchronous>, transform_indices = @transform_1, window_bounds = array<i64: 32, 96>}, {pipeline_mode = #tpu.pipeline_mode<synchronous>, transform_indices = @transform_2, window_bounds = array<i64: 1, 96>}, {pipeline_mode = #tpu.pipeline_mode<synchronous>, transform_indices = @transform_3, window_bounds = array<i64: 32, 32>}, {pipeline_mode = #tpu.pipeline_mode<synchronous>, transform_indices = @transform_4, window_bounds = array<i64: 32, 64>}, {pipeline_mode = #tpu.pipeline_mode<synchronous>, transform_indices = @transform_5, window_bounds = array<i64: 64, 64>}, {pipeline_mode = #tpu.pipeline_mode<synchronous>, transform_indices = @transform_6, window_bounds = array<i64: 64, 32>}, {pipeline_mode = #tpu.pipeline_mode<synchronous>, transform_indices = @transform_7, window_bounds = array<i64: 6, 32>}, {pipeline_mode = #tpu.pipeline_mode<synchronous>, transform_indices = @transform_8, window_bounds = array<i64: 2, 64>}, {transform_indices = @transform_9, window_bounds = array<i64: 16, 32>}]} {
    %c0 = arith.constant 0 : index
    %c0_0 = arith.constant 0 : index
    %0 = vector.load %arg1[%c0, %c0_0] : memref<16x32xf32, #tpu.memory_space<vmem>>, vector<16x32xf32>
    %c0_1 = arith.constant 0 : index
    %c0_2 = arith.constant 0 : index
    %1 = vector.load %arg2[%c0_1, %c0_2] : memref<32x96xf32, #tpu.memory_space<vmem>>, vector<32x96xf32>
    %cst = arith.constant dense<0.000000e+00> : vector<16x96xf32>
    %2 = tpu.matmul %0, %1, %cst {dimension_numbers = #tpu.dot_dimension_numbers<[1], [0], [0], [1], [0, 0, 1, 1], [], []>} : vector<16x32xf32>, vector<32x96xf32>, vector<16x96xf32> -> vector<16x96xf32>
    %c0_3 = arith.constant 0 : index
    %c0_4 = arith.constant 0 : index
    %3 = vector.load %arg3[%c0_3, %c0_4] : memref<1x96xf32, #tpu.memory_space<vmem>>, vector<1x96xf32>
    %4 = vector.broadcast %3 : vector<1x96xf32> to vector<16x96xf32>
    %5 = arith.addf %2, %4 : vector<16x96xf32>
    %6 = vector.extract_strided_slice %5 {offsets = [0, 0], sizes = [16, 32], strides = [1, 1]} : vector<16x96xf32> to vector<16x32xf32>
    %7 = vector.extract_strided_slice %5 {offsets = [0, 32], sizes = [16, 32], strides = [1, 1]} : vector<16x96xf32> to vector<16x32xf32>
    %8 = vector.extract_strided_slice %5 {offsets = [0, 64], sizes = [16, 32], strides = [1, 1]} : vector<16x96xf32> to vector<16x32xf32>
    %9 = vector.shape_cast %6 : vector<16x32xf32> to vector<2x8x4x8xf32>
    %10 = tpu.transpose %9, [0, 2, 1, 3] : vector<2x8x4x8xf32> -> vector<2x4x8x8xf32>
    %11 = vector.shape_cast %10 : vector<2x4x8x8xf32> to vector<8x8x8xf32>
    %12 = vector.shape_cast %7 : vector<16x32xf32> to vector<2x8x4x8xf32>
    %13 = tpu.transpose %12, [0, 2, 1, 3] : vector<2x8x4x8xf32> -> vector<2x4x8x8xf32>
    %14 = vector.shape_cast %13 : vector<2x4x8x8xf32> to vector<8x8x8xf32>
    %15 = vector.shape_cast %8 : vector<16x32xf32> to vector<2x8x4x8xf32>
    %16 = tpu.transpose %15, [0, 2, 1, 3] : vector<2x8x4x8xf32> -> vector<2x4x8x8xf32>
    %17 = vector.shape_cast %16 : vector<2x4x8x8xf32> to vector<8x8x8xf32>
    %cst_5 = arith.constant dense<0.000000e+00> : vector<8x8x8xf32>
    %18 = tpu.matmul %11, %14, %cst_5 {dimension_numbers = #tpu.dot_dimension_numbers<[2], [2], [1], [1], [0, 0, 0, 1, 1, 1], [0], [0]>} : vector<8x8x8xf32>, vector<8x8x8xf32>, vector<8x8x8xf32> -> vector<8x8x8xf32>
    %19 = tpu.iota {dimensions = array<i32: 0>} : vector<8x8xi32>
    %20 = tpu.iota {dimensions = array<i32: 1>} : vector<8x8xi32>
    %21 = arith.cmpi eq, %19, %20 : vector<8x8xi32>
    %22 = vector.shape_cast %21 : vector<8x8xi1> to vector<1x8x8xi1>
    %cst_6 = arith.constant -1.000000e+30 : f32
    %23 = vector.shape_cast %22 : vector<1x8x8xi1> to vector<1x8x8xi1>
    %24 = vector.broadcast %23 : vector<1x8x8xi1> to vector<8x8x8xi1>
    %25 = vector.broadcast %cst_6 : f32 to vector<8x8x8xf32>
    %26 = arith.select %24, %25, %18 : vector<8x8x8xi1>, vector<8x8x8xf32>
    %cst_7 = arith.constant dense<0xFF800000> : vector<8x8xf32>
    %27 = vector.multi_reduction <maximumf>, %26, %cst_7 [2] : vector<8x8x8xf32> to vector<8x8xf32>
    %28 = vector.shape_cast %27 : vector<8x8xf32> to vector<8x8x1xf32>
    %29 = vector.broadcast %28 : vector<8x8x1xf32> to vector<8x8x8xf32>
    %30 = arith.subf %26, %29 : vector<8x8x8xf32>
    %31 = math.exp %30 : vector<8x8x8xf32>
    %cst_8 = arith.constant dense<0.000000e+00> : vector<8x8xf32>
    %32 = vector.multi_reduction <add>, %31, %cst_8 [2] : vector<8x8x8xf32> to vector<8x8xf32>
    %33 = vector.shape_cast %32 : vector<8x8xf32> to vector<8x8x1xf32>
    %34 = tpu.reciprocal %33 {approx = true} : vector<8x8x1xf32> -> vector<8x8x1xf32>
    %35 = vector.broadcast %34 : vector<8x8x1xf32> to vector<8x8x8xf32>
    %36 = arith.mulf %31, %35 : vector<8x8x8xf32>
    %cst_9 = arith.constant dense<0.000000e+00> : vector<8x8x8xf32>
    %37 = tpu.matmul %36, %17, %cst_9 {dimension_numbers = #tpu.dot_dimension_numbers<[2], [1], [1], [2], [0, 0, 0, 1, 1, 2], [0], [0]>} : vector<8x8x8xf32>, vector<8x8x8xf32>, vector<8x8x8xf32> -> vector<8x8x8xf32>
    %38 = vector.shape_cast %37 : vector<8x8x8xf32> to vector<2x4x8x8xf32>
    %39 = tpu.transpose %38, [0, 2, 1, 3] : vector<2x4x8x8xf32> -> vector<2x8x4x8xf32>
    %40 = vector.shape_cast %39 : vector<2x8x4x8xf32> to vector<16x32xf32>
    %c0_10 = arith.constant 0 : index
    %c0_11 = arith.constant 0 : index
    %41 = vector.load %arg4[%c0_10, %c0_11] : memref<32x32xf32, #tpu.memory_space<vmem>>, vector<32x32xf32>
    %cst_12 = arith.constant dense<0.000000e+00> : vector<16x32xf32>
    %42 = tpu.matmul %40, %41, %cst_12 {dimension_numbers = #tpu.dot_dimension_numbers<[1], [0], [0], [1], [0, 0, 1, 1], [], []>} : vector<16x32xf32>, vector<32x32xf32>, vector<16x32xf32> -> vector<16x32xf32>
    %c0_13 = arith.constant 0 : index
    %c0_14 = arith.constant 0 : index
    %43 = vector.load %arg8[%c0_13, %c0_14] : memref<6x32xf32, #tpu.memory_space<vmem>>, vector<1x32xf32>
    %44 = vector.broadcast %43 : vector<1x32xf32> to vector<16x32xf32>
    %45 = arith.addf %42, %44 : vector<16x32xf32>
    %46 = arith.addf %0, %45 : vector<16x32xf32>
    %c1 = arith.constant 1 : index
    %c0_15 = arith.constant 0 : index
    %47 = vector.load %arg8[%c1, %c0_15] : memref<6x32xf32, #tpu.memory_space<vmem>>, vector<1x32xf32>
    %c2 = arith.constant 2 : index
    %c0_16 = arith.constant 0 : index
    %48 = vector.load %arg8[%c2, %c0_16] : memref<6x32xf32, #tpu.memory_space<vmem>>, vector<1x32xf32>
    %cst_17 = arith.constant dense<0.000000e+00> : vector<16xf32>
    %49 = vector.multi_reduction <add>, %46, %cst_17 [1] : vector<16x32xf32> to vector<16xf32>
    %50 = vector.shape_cast %49 : vector<16xf32> to vector<16x1xf32>
    %cst_18 = arith.constant 3.200000e+01 : f32
    %51 = vector.broadcast %cst_18 : f32 to vector<16x1xf32>
    %52 = arith.divf %50, %51 : vector<16x1xf32>
    %53 = vector.broadcast %52 : vector<16x1xf32> to vector<16x32xf32>
    %54 = arith.subf %46, %53 : vector<16x32xf32>
    %55 = arith.mulf %54, %54 : vector<16x32xf32>
    %cst_19 = arith.constant dense<0.000000e+00> : vector<16xf32>
    %56 = vector.multi_reduction <add>, %55, %cst_19 [1] : vector<16x32xf32> to vector<16xf32>
    %57 = vector.shape_cast %56 : vector<16xf32> to vector<16x1xf32>
    %cst_20 = arith.constant 3.200000e+01 : f32
    %58 = vector.broadcast %cst_20 : f32 to vector<16x1xf32>
    %59 = arith.divf %57, %58 : vector<16x1xf32>
    %60 = vector.broadcast %52 : vector<16x1xf32> to vector<16x32xf32>
    %61 = arith.subf %46, %60 : vector<16x32xf32>
    %cst_21 = arith.constant 9.99999974E-6 : f32
    %62 = vector.broadcast %cst_21 : f32 to vector<16x1xf32>
    %63 = arith.addf %59, %62 : vector<16x1xf32>
    %64 = math.rsqrt %63 : vector<16x1xf32>
    %65 = vector.broadcast %64 : vector<16x1xf32> to vector<16x32xf32>
    %66 = arith.mulf %61, %65 : vector<16x32xf32>
    %67 = vector.broadcast %47 : vector<1x32xf32> to vector<16x32xf32>
    %68 = arith.mulf %66, %67 : vector<16x32xf32>
    %69 = vector.broadcast %48 : vector<1x32xf32> to vector<16x32xf32>
    %70 = arith.addf %68, %69 : vector<16x32xf32>
    %c0_22 = arith.constant 0 : index
    %c0_23 = arith.constant 0 : index
    %71 = vector.load %arg5[%c0_22, %c0_23] : memref<32x64xf32, #tpu.memory_space<vmem>>, vector<32x64xf32>
    %cst_24 = arith.constant dense<0.000000e+00> : vector<16x64xf32>
    %72 = tpu.matmul %70, %71, %cst_24 {dimension_numbers = #tpu.dot_dimension_numbers<[1], [0], [0], [1], [0, 0, 1, 1], [], []>} : vector<16x32xf32>, vector<32x64xf32>, vector<16x64xf32> -> vector<16x64xf32>
    %c0_25 = arith.constant 0 : index
    %c0_26 = arith.constant 0 : index
    %73 = vector.load %arg9[%c0_25, %c0_26] : memref<2x64xf32, #tpu.memory_space<vmem>>, vector<1x64xf32>
    %74 = vector.broadcast %73 : vector<1x64xf32> to vector<16x64xf32>
    %75 = arith.addf %72, %74 : vector<16x64xf32>
    %76 = arith.mulf %75, %75 : vector<16x64xf32>
    %77 = arith.mulf %75, %76 : vector<16x64xf32>
    %cst_27 = arith.constant 4.471500e-02 : f32
    %78 = vector.broadcast %cst_27 : f32 to vector<16x64xf32>
    %79 = arith.mulf %78, %77 : vector<16x64xf32>
    %80 = arith.addf %75, %79 : vector<16x64xf32>
    %cst_28 = arith.constant 0.797884583 : f32
    %81 = vector.broadcast %cst_28 : f32 to vector<16x64xf32>
    %82 = arith.mulf %81, %80 : vector<16x64xf32>
    %83 = math.tanh %82 : vector<16x64xf32>
    %cst_29 = arith.constant 1.000000e+00 : f32
    %84 = vector.broadcast %cst_29 : f32 to vector<16x64xf32>
    %85 = arith.addf %84, %83 : vector<16x64xf32>
    %cst_30 = arith.constant 5.000000e-01 : f32
    %86 = vector.broadcast %cst_30 : f32 to vector<16x64xf32>
    %87 = arith.mulf %86, %85 : vector<16x64xf32>
    %88 = arith.mulf %75, %87 : vector<16x64xf32>
    %c0_31 = arith.constant 0 : index
    %c0_32 = arith.constant 0 : index
    %89 = vector.load %arg6[%c0_31, %c0_32] : memref<64x64xf32, #tpu.memory_space<vmem>>, vector<64x64xf32>
    %cst_33 = arith.constant dense<0.000000e+00> : vector<16x64xf32>
    %90 = tpu.matmul %88, %89, %cst_33 {dimension_numbers = #tpu.dot_dimension_numbers<[1], [0], [0], [1], [0, 0, 1, 1], [], []>} : vector<16x64xf32>, vector<64x64xf32>, vector<16x64xf32> -> vector<16x64xf32>
    %c1_34 = arith.constant 1 : index
    %c0_35 = arith.constant 0 : index
    %91 = vector.load %arg9[%c1_34, %c0_35] : memref<2x64xf32, #tpu.memory_space<vmem>>, vector<1x64xf32>
    %92 = vector.broadcast %91 : vector<1x64xf32> to vector<16x64xf32>
    %93 = arith.addf %90, %92 : vector<16x64xf32>
    %94 = arith.mulf %93, %93 : vector<16x64xf32>
    %95 = arith.mulf %93, %94 : vector<16x64xf32>
    %cst_36 = arith.constant 4.471500e-02 : f32
    %96 = vector.broadcast %cst_36 : f32 to vector<16x64xf32>
    %97 = arith.mulf %96, %95 : vector<16x64xf32>
    %98 = arith.addf %93, %97 : vector<16x64xf32>
    %cst_37 = arith.constant 0.797884583 : f32
    %99 = vector.broadcast %cst_37 : f32 to vector<16x64xf32>
    %100 = arith.mulf %99, %98 : vector<16x64xf32>
    %101 = math.tanh %100 : vector<16x64xf32>
    %cst_38 = arith.constant 1.000000e+00 : f32
    %102 = vector.broadcast %cst_38 : f32 to vector<16x64xf32>
    %103 = arith.addf %102, %101 : vector<16x64xf32>
    %cst_39 = arith.constant 5.000000e-01 : f32
    %104 = vector.broadcast %cst_39 : f32 to vector<16x64xf32>
    %105 = arith.mulf %104, %103 : vector<16x64xf32>
    %106 = arith.mulf %93, %105 : vector<16x64xf32>
    %c0_40 = arith.constant 0 : index
    %c0_41 = arith.constant 0 : index
    %107 = vector.load %arg7[%c0_40, %c0_41] : memref<64x32xf32, #tpu.memory_space<vmem>>, vector<64x32xf32>
    %cst_42 = arith.constant dense<0.000000e+00> : vector<16x32xf32>
    %108 = tpu.matmul %106, %107, %cst_42 {dimension_numbers = #tpu.dot_dimension_numbers<[1], [0], [0], [1], [0, 0, 1, 1], [], []>} : vector<16x64xf32>, vector<64x32xf32>, vector<16x32xf32> -> vector<16x32xf32>
    %c3 = arith.constant 3 : index
    %c0_43 = arith.constant 0 : index
    %109 = vector.load %arg8[%c3, %c0_43] : memref<6x32xf32, #tpu.memory_space<vmem>>, vector<1x32xf32>
    %110 = vector.broadcast %109 : vector<1x32xf32> to vector<16x32xf32>
    %111 = arith.addf %108, %110 : vector<16x32xf32>
    %112 = arith.addf %70, %111 : vector<16x32xf32>
    %c4 = arith.constant 4 : index
    %c0_44 = arith.constant 0 : index
    %113 = vector.load %arg8[%c4, %c0_44] : memref<6x32xf32, #tpu.memory_space<vmem>>, vector<1x32xf32>
    %c5 = arith.constant 5 : index
    %c0_45 = arith.constant 0 : index
    %114 = vector.load %arg8[%c5, %c0_45] : memref<6x32xf32, #tpu.memory_space<vmem>>, vector<1x32xf32>
    %cst_46 = arith.constant dense<0.000000e+00> : vector<16xf32>
    %115 = vector.multi_reduction <add>, %112, %cst_46 [1] : vector<16x32xf32> to vector<16xf32>
    %116 = vector.shape_cast %115 : vector<16xf32> to vector<16x1xf32>
    %cst_47 = arith.constant 3.200000e+01 : f32
    %117 = vector.broadcast %cst_47 : f32 to vector<16x1xf32>
    %118 = arith.divf %116, %117 : vector<16x1xf32>
    %119 = vector.broadcast %118 : vector<16x1xf32> to vector<16x32xf32>
    %120 = arith.subf %112, %119 : vector<16x32xf32>
    %121 = arith.mulf %120, %120 : vector<16x32xf32>
    %cst_48 = arith.constant dense<0.000000e+00> : vector<16xf32>
    %122 = vector.multi_reduction <add>, %121, %cst_48 [1] : vector<16x32xf32> to vector<16xf32>
    %123 = vector.shape_cast %122 : vector<16xf32> to vector<16x1xf32>
    %cst_49 = arith.constant 3.200000e+01 : f32
    %124 = vector.broadcast %cst_49 : f32 to vector<16x1xf32>
    %125 = arith.divf %123, %124 : vector<16x1xf32>
    %126 = vector.broadcast %118 : vector<16x1xf32> to vector<16x32xf32>
    %127 = arith.subf %112, %126 : vector<16x32xf32>
    %cst_50 = arith.constant 9.99999974E-6 : f32
    %128 = vector.broadcast %cst_50 : f32 to vector<16x1xf32>
    %129 = arith.addf %125, %128 : vector<16x1xf32>
    %130 = math.rsqrt %129 : vector<16x1xf32>
    %131 = vector.broadcast %130 : vector<16x1xf32> to vector<16x32xf32>
    %132 = arith.mulf %127, %131 : vector<16x32xf32>
    %133 = vector.broadcast %113 : vector<1x32xf32> to vector<16x32xf32>
    %134 = arith.mulf %132, %133 : vector<16x32xf32>
    %135 = vector.broadcast %114 : vector<1x32xf32> to vector<16x32xf32>
    %136 = arith.addf %134, %135 : vector<16x32xf32>
    %c0_51 = arith.constant 0 : index
    %c0_52 = arith.constant 0 : index
    %137 = vector.load %arg10[%c0_51, %c0_52] : memref<16x32xf32, #tpu.memory_space<vmem>>, vector<16x32xf32>
    tpu.vector_store %arg10[%c0_51, %c0_52], %136 {strides = array<i32>} : memref<16x32xf32, #tpu.memory_space<vmem>>, vector<16x32xf32>,
    return
  }
  func.func @transform_0(%arg0: i32) -> (i32, i32) {
    %c0_i32 = arith.constant 0 : i32
    %c0_i32_0 = arith.constant 0 : i32
    return %arg0, %c0_i32 : i32, i32
  }
  func.func @transform_1(%arg0: i32) -> (i32, i32) {
    %c0_i32 = arith.constant 0 : i32
    %c0_i32_0 = arith.constant 0 : i32
    %c0_i32_1 = arith.constant 0 : i32
    return %c0_i32, %c0_i32_0 : i32, i32
  }
  func.func @transform_2(%arg0: i32) -> (i32, i32) {
    %c0_i32 = arith.constant 0 : i32
    %c0_i32_0 = arith.constant 0 : i32
    %c0_i32_1 = arith.constant 0 : i32
    return %c0_i32, %c0_i32_0 : i32, i32
  }
  func.func @transform_3(%arg0: i32) -> (i32, i32) {
    %c0_i32 = arith.constant 0 : i32
    %c0_i32_0 = arith.constant 0 : i32
    %c0_i32_1 = arith.constant 0 : i32
    return %c0_i32, %c0_i32_0 : i32, i32
  }
  func.func @transform_4(%arg0: i32) -> (i32, i32) {
    %c0_i32 = arith.constant 0 : i32
    %c0_i32_0 = arith.constant 0 : i32
    %c0_i32_1 = arith.constant 0 : i32
    return %c0_i32, %c0_i32_0 : i32, i32
  }
  func.func @transform_5(%arg0: i32) -> (i32, i32) {
    %c0_i32 = arith.constant 0 : i32
    %c0_i32_0 = arith.constant 0 : i32
    %c0_i32_1 = arith.constant 0 : i32
    return %c0_i32, %c0_i32_0 : i32, i32
  }
  func.func @transform_6(%arg0: i32) -> (i32, i32) {
    %c0_i32 = arith.constant 0 : i32
    %c0_i32_0 = arith.constant 0 : i32
    %c0_i32_1 = arith.constant 0 : i32
    return %c0_i32, %c0_i32_0 : i32, i32
  }
  func.func @transform_7(%arg0: i32) -> (i32, i32) {
    %c0_i32 = arith.constant 0 : i32
    %c0_i32_0 = arith.constant 0 : i32
    %c0_i32_1 = arith.constant 0 : i32
    return %c0_i32, %c0_i32_0 : i32, i32
  }
  func.func @transform_8(%arg0: i32) -> (i32, i32) {
    %c0_i32 = arith.constant 0 : i32
    %c0_i32_0 = arith.constant 0 : i32
    %c0_i32_1 = arith.constant 0 : i32
    return %c0_i32, %c0_i32_0 : i32, i32
  }
  func.func @transform_9(%arg0: i32) -> (i32, i32) {
    %c0_i32 = arith.constant 0 : i32
    %c0_i32_0 = arith.constant 0 : i32
    return %arg0, %c0_i32 : i32, i32
  }
}

</mosaic_0001>

<llo_original>
// kernel: tpu_custom_call.1
$region0: #{tpu_custom_call.1}
  #allocation0 [shape = 'u32[]', space=smem, size = 0x4, offset = 0x4, fixed_abs, tag = 'smem constant byte address 0x4 - core index']
  #allocation1 [shape = 'u32[72,128]{1,0:T(1,128)}', space=vmem, size = 0x9000, scoped, tag = 'internal scratch']
  %s0 = inlined_call_operand.hbm [shape: f32[16,32], index: 0, kind: input, shape index: {}]
  %s1 = inlined_call_operand.vmem [shape: f32[32,96], index: 1, kind: input, shape index: {}]
  %s2 = inlined_call_operand.vmem [shape: f32[1,96], index: 2, kind: input, shape index: {}]
  %s3 = inlined_call_operand.hbm [shape: f32[32,32], index: 3, kind: input, shape index: {}]
  %s4 = inlined_call_operand.hbm [shape: f32[32,64], index: 4, kind: input, shape index: {}]
  %s5 = inlined_call_operand.vmem [shape: f32[64,64], index: 5, kind: input, shape index: {}]
  %s6 = inlined_call_operand.vmem [shape: f32[64,32], index: 6, kind: input, shape index: {}]
  %s7 = inlined_call_operand.hbm [shape: f32[6,32], index: 7, kind: input, shape index: {}]
  %s8 = inlined_call_operand.vmem [shape: f32[2,64], index: 8, kind: input, shape index: {}]
  %s9 = inlined_call_operand.hbm [shape: f32[16,32], index: 9, kind: output, shape index: {}]
  %s10 = sld [smem:[#allocation0]]
  $region62: #{tpu_custom_call.1} parent=0
    _
  %s12 = ssub.s32 1, %s10
  %s13 = scalar_select 0, %s12, %s10
  $region1: #{tpu_custom_call.1} parent=0
    #allocation2 [shape = 'u8[8192]{0}', space=vmem, size = 0x2000, scoped, tag = 'input window, operand 0, single buffered']
    #allocation3 [shape = 's32[1]{0}', space=sflag, size = 0x4, scoped, tag = 'scoped memory for tpu_custom_call.1']
    #allocation4 [shape = 's32[1]{0}', space=sflag, size = 0x4, scoped, tag = 'scoped memory for tpu_custom_call.1']
    #allocation5 [shape = 'u8[16384]{0}', space=vmem, size = 0x4000, scoped, tag = 'input window, operand 3, single buffered']
    #allocation6 [shape = 's32[1]{0}', space=sflag, size = 0x4, scoped, tag = 'scoped memory for tpu_custom_call.1']
    #allocation7 [shape = 'u8[16384]{0}', space=vmem, size = 0x4000, scoped, tag = 'input window, operand 4, single buffered']
    #allocation8 [shape = 'u8[4096]{0}', space=vmem, size = 0x1000, scoped, tag = 'input window, operand 7, single buffered']
    #allocation9 [shape = 's32[1]{0}', space=sflag, size = 0x4, scoped, tag = 'scoped memory for tpu_custom_call.1']
    #allocation10 [shape = 'u8[8192]{0}', space=vmem, size = 0x2000, scoped, tag = 'output window, operand 0, single buffered']
    %14 = vsyncpa [#allocation3], 0
    %15 = vsyncpa [#allocation6], 0
    %16 = vsyncpa [#allocation9], 0
    %17 = vsyncpa [#allocation4], 0
    // Predicated region
    $region2: #{tpu_custom_call.1} parent=1 // pred_check
      _
    $region3: #{tpu_custom_call.1} parent=1 // pred_check_branch
      %19 = sbr.rel (0) target = $region5
    $region4: #{tpu_custom_call.1} parent=1 // pred_region
      %21 = vsyncadd [#allocation3], 0
      %s22 = sshll.u32 %s0, 4
      %s23 = int_to_ptr.hbm [resolvable:$true] %s22
      %s24 = sshll.u32 [#allocation2], 4
      %s25 = int_to_ptr.vmem [resolvable:$true] %s24
      %30 = dma.hbm_to_vmem [thread:$0]  %s23, 256, %s25, [#allocation3], 128, 128, 8
    $region5: #{tpu_custom_call.1} parent=1 // pred_fallthru
      _
    // Predicated region
    $region6: #{tpu_custom_call.1} parent=1 // pred_check
      _
    $region7: #{tpu_custom_call.1} parent=1 // pred_check_branch
      %32 = sbr.rel (0) target = $region9
    $region8: #{tpu_custom_call.1} parent=1 // pred_region
      _
    $region9: #{tpu_custom_call.1} parent=1 // pred_fallthru
      _
    // Predicated region
    $region10: #{tpu_custom_call.1} parent=1 // pred_check
      _
    $region11: #{tpu_custom_call.1} parent=1 // pred_check_branch
      %34 = sbr.rel (0) target = $region13
    $region12: #{tpu_custom_call.1} parent=1 // pred_region
      _
    $region13: #{tpu_custom_call.1} parent=1 // pred_fallthru
      _
    // Predicated region
    $region14: #{tpu_custom_call.1} parent=1 // pred_check
      _
    $region15: #{tpu_custom_call.1} parent=1 // pred_check_branch
      %36 = sbr.rel (0) target = $region17
    $region16: #{tpu_custom_call.1} parent=1 // pred_region
      %38 = vsyncadd [#allocation6], 0
      %s39 = sshll.u32 %s3, 4
      %s40 = int_to_ptr.hbm [resolvable:$true] %s39
      %s41 = sshll.u32 [#allocation5], 4
      %s42 = int_to_ptr.vmem [resolvable:$true] %s41
      %47 = dma.hbm_to_vmem [thread:$0]  %s40, 512, %s42, [#allocation6], 128, 128, 8
    $region17: #{tpu_custom_call.1} parent=1 // pred_fallthru
      _
    // Predicated region
    $region18: #{tpu_custom_call.1} parent=1 // pred_check
      _
    $region19: #{tpu_custom_call.1} parent=1 // pred_check_branch
      %49 = sbr.rel (0) target = $region21
    $region20: #{tpu_custom_call.1} parent=1 // pred_region
      %51 = vsyncadd [#allocation6], 0
      %s52 = sshll.u32 %s4, 4
      %s53 = int_to_ptr.hbm [resolvable:$true] %s52
      %s54 = sshll.u32 [#allocation7], 4
      %s55 = int_to_ptr.vmem [resolvable:$true] %s54
      %60 = dma.hbm_to_vmem [thread:$0]  %s53, 512, %s55, [#allocation6], 128, 128, 8
    $region21: #{tpu_custom_call.1} parent=1 // pred_fallthru
      _
    // Predicated region
    $region22: #{tpu_custom_call.1} parent=1 // pred_check
      _
    $region23: #{tpu_custom_call.1} parent=1 // pred_check_branch
      %62 = sbr.rel (0) target = $region25
    $region24: #{tpu_custom_call.1} parent=1 // pred_region
      _
    $region25: #{tpu_custom_call.1} parent=1 // pred_fallthru
      _
    // Predicated region
    $region26: #{tpu_custom_call.1} parent=1 // pred_check
      _
    $region27: #{tpu_custom_call.1} parent=1 // pred_check_branch
      %64 = sbr.rel (0) target = $region29
    $region28: #{tpu_custom_call.1} parent=1 // pred_region
      _
    $region29: #{tpu_custom_call.1} parent=1 // pred_fallthru
      _
    // Predicated region
    $region30: #{tpu_custom_call.1} parent=1 // pred_check
      _
    $region31: #{tpu_custom_call.1} parent=1 // pred_check_branch
      %66 = sbr.rel (0) target = $region33
    $region32: #{tpu_custom_call.1} parent=1 // pred_region
      %68 = vsyncadd [#allocation9], 0
      %s70 = sshll.u32 %s7, 4
      %s71 = int_to_ptr.hbm [resolvable:$true] %s70
      %s72 = sshll.u32 [#allocation8], 4
      %s73 = int_to_ptr.vmem [resolvable:$true] %s72
      %75 = dma.hbm_to_vmem [thread:$0]  %s71, 128, %s73, [#allocation9]
    $region33: #{tpu_custom_call.1} parent=1 // pred_fallthru
      _
    // Predicated region
    $region34: #{tpu_custom_call.1} parent=1 // pred_check
      _
    $region35: #{tpu_custom_call.1} parent=1 // pred_check_branch
      %77 = sbr.rel (0) target = $region37
    $region36: #{tpu_custom_call.1} parent=1 // pred_region
      _
    $region37: #{tpu_custom_call.1} parent=1 // pred_fallthru
      _
    // Predicated region
    $region38: #{tpu_custom_call.1} parent=1 // pred_check
      _
    $region39: #{tpu_custom_call.1} parent=1 // pred_check_branch
      %79 = sbr.rel (0) target = $region41
    $region40: #{tpu_custom_call.1} parent=1 // pred_region
      %81 = dma.done [#allocation3], 256
    $region41: #{tpu_custom_call.1} parent=1 // pred_fallthru
      _
    // Predicated region
    $region42: #{tpu_custom_call.1} parent=1 // pred_check
      _
    $region43: #{tpu_custom_call.1} parent=1 // pred_check_branch
      %83 = sbr.rel (0) target = $region45
    $region44: #{tpu_custom_call.1} parent=1 // pred_region
      %85 = dma.done [#allocation6], 512
    $region45: #{tpu_custom_call.1} parent=1 // pred_fallthru
      _
    // Predicated region
    $region46: #{tpu_custom_call.1} parent=1 // pred_check
      _
    $region47: #{tpu_custom_call.1} parent=1 // pred_check_branch
      %87 = sbr.rel (0) target = $region49
    $region48: #{tpu_custom_call.1} parent=1 // pred_region
      %89 = dma.done [#allocation6], 512
    $region49: #{tpu_custom_call.1} parent=1 // pred_fallthru
      _
    // Predicated region
    $region50: #{tpu_custom_call.1} parent=1 // pred_check
      _
    $region51: #{tpu_custom_call.1} parent=1 // pred_check_branch
      %91 = sbr.rel (0) target = $region53
    $region52: #{tpu_custom_call.1} parent=1 // pred_region
      %93 = dma.done [#allocation9], 128
    $region53: #{tpu_custom_call.1} parent=1 // pred_fallthru
      _
    %v94 = vld [vmem:[#allocation2] sm:$0xff]
    %v95 = vld [vmem:[#allocation2 + $0x8] sm:$0xff]
    %v96 = vld [vmem:[%s1] sm:$0xff]
    %v97 = vld [vmem:[%s1 + $0x8] sm:$0xff]
    %v98 = vld [vmem:[%s1 + $0x10] sm:$0xff]
    %v99 = vld [vmem:[%s1 + $0x18] sm:$0xff]
    %v100 = vld [vmem:[%s2] sm:$0x1]
    %v102 = vperm.slane %v100, 0
    %vm104 = vcmask 261120
    %v106 = vsel %vm104, %v94, 0
    %v109 = vsel %vm104, %v95, 0
    %111 = vmatpush.msra.mxu0 0.0
    %112 = vmatpush.msra.mxu0 0.0
    %113 = vmatpush.msra.mxu0 0.0
    %114 = vmatpush.msra.mxu0 0.0
    %115 = vmatpush.msra.mxu0 0.0
    %116 = vmatpush.msra.mxu0 0.0
    %117 = vmatpush.msra.mxu0 0.0
    %118 = vmatpush.msra.mxu0 0.0
    %119 = vmatpush.msra.mxu0 0.0
    %120 = vmatpush.msra.mxu0 0.0
    %121 = vmatpush.msra.mxu0 0.0
    %122 = vmatpush.msra.mxu0 0.0
    %123 = vmatpush.msra.mxu0 %v99
    %124 = vmatpush.msra.mxu0 %v98
    %125 = vmatpush.msra.mxu0 %v97
    %126 = vmatpush.msra.mxu0 %v96
    %127 = vmatmul.f32.gmra.mxu0 %v106
    %v128 = vpop.f32.mrf.mxu0
    %v129 = vadd.f32 %v102, %v128
    %130 = vmatmul.f32.gmra.mxu0 %v109
    %v131 = vpop.f32.mrf.mxu0
    %v132 = vadd.f32 %v102, %v131
    %133 = vdwg.mxu0
    %136 = vrot.lane.b32.xlu0 %v129, 120
    %v137 = vpop.permute.xlu0 %136
    %138 = vrot.lane.b32.xlu0 %v132, 120
    %v139 = vpop.permute.xlu0 %138
    %142 = vrot.lane.b32.xlu0 %v129, 112
    %v143 = vpop.permute.xlu0 %142
    %144 = vrot.lane.b32.xlu0 %v132, 112
    %v145 = vpop.permute.xlu0 %144
    %148 = vrot.lane.b32.xlu0 %v129, 104
    %v149 = vpop.permute.xlu0 %148
    %150 = vrot.lane.b32.xlu0 %v132, 104
    %v151 = vpop.permute.xlu0 %150
    %v154 = vrot.slane %v143, 4
    %vm155 = vcmask 1047556
    %v156 = vsel %vm155, %v154, %v129
    %v157 = vrot.slane %v129, 4
    %v158 = vsel %vm155, %v143, %v157
    %v160 = vunpack.c.l.s4 1983009808
    %v161 = vunpack.c.0.s8 %v160
    %v162 = vperm.slane %v156, %v161
    %v164 = vunpack.c.l.s4 1983009808
    %v165 = vunpack.c.0.s8 %v164
    %v166 = vperm.slane %v158, %v165
    %v167 = vrot.slane %v149, 4
    %v168 = vsel %vm155, %v167, %v137
    %v169 = vrot.slane %v137, 4
    %v170 = vsel %vm155, %v149, %v169
    %v172 = vunpack.c.l.s4 1983009808
    %v173 = vunpack.c.0.s8 %v172
    %v174 = vperm.slane %v168, %v173
    %v176 = vunpack.c.l.s4 1983009808
    %v177 = vunpack.c.0.s8 %v176
    %v178 = vperm.slane %v170, %v177
    %v179 = vrot.slane %v174, 4
    %v180 = vsel %vm155, %v179, %v162
    %v181 = vrot.slane %v162, 4
    %v182 = vsel %vm155, %v174, %v181
    %v184 = vunpack.c.l.s4 1934713408
    %v185 = vunpack.c.0.s8 %v184
    %v186 = vperm.slane %v180, %v185
    %v188 = vunpack.c.l.s4 1934713408
    %v189 = vunpack.c.0.s8 %v188
    %v190 = vperm.slane %v182, %v189
    %v191 = vrot.slane %v178, 4
    %v192 = vsel %vm155, %v191, %v166
    %v193 = vrot.slane %v166, 4
    %v194 = vsel %vm155, %v178, %v193
    %v196 = vunpack.c.l.s4 1934713408
    %v197 = vunpack.c.0.s8 %v196
    %v198 = vperm.slane %v192, %v197
    %v200 = vunpack.c.l.s4 1934713408
    %v201 = vunpack.c.0.s8 %v200
    %v202 = vperm.slane %v194, %v201
    %v203 = vrot.slane %v186, 4
    %v204 = vsel %vm155, 0.0, %v203
    %v205 = vrot.slane %v190, 4
    %v206 = vsel %vm155, 0.0, %v205
    %v207 = vrot.slane %v198, 4
    %v208 = vsel %vm155, 0.0, %v207
    %v209 = vrot.slane %v202, 4
    %v210 = vsel %vm155, 0.0, %v209
    %v211 = vrot.slane %v145, 4
    %v212 = vsel %vm155, %v211, %v132
    %v213 = vrot.slane %v132, 4
    %v214 = vsel %vm155, %v145, %v213
    %v216 = vunpack.c.l.s4 1983009808
    %v217 = vunpack.c.0.s8 %v216
    %v218 = vperm.slane %v212, %v217
    %v220 = vunpack.c.l.s4 1983009808
    %v221 = vunpack.c.0.s8 %v220
    %v222 = vperm.slane %v214, %v221
    %v223 = vrot.slane %v151, 4
    %v224 = vsel %vm155, %v223, %v139
    %v225 = vrot.slane %v139, 4
    %v226 = vsel %vm155, %v151, %v225
    %v228 = vunpack.c.l.s4 1983009808
    %v229 = vunpack.c.0.s8 %v228
    %v230 = vperm.slane %v224, %v229
    %v232 = vunpack.c.l.s4 1983009808
    %v233 = vunpack.c.0.s8 %v232
    %v234 = vperm.slane %v226, %v233
    %v235 = vrot.slane %v230, 4
    %v236 = vsel %vm155, %v235, %v218
    %v237 = vrot.slane %v218, 4
    %v238 = vsel %vm155, %v230, %v237
    %v240 = vunpack.c.l.s4 1934713408
    %v241 = vunpack.c.0.s8 %v240
    %v242 = vperm.slane %v236, %v241
    %v244 = vunpack.c.l.s4 1934713408
    %v245 = vunpack.c.0.s8 %v244
    %v246 = vperm.slane %v238, %v245
    %v247 = vrot.slane %v234, 4
    %v248 = vsel %vm155, %v247, %v222
    %v249 = vrot.slane %v222, 4
    %v250 = vsel %vm155, %v234, %v249
    %v252 = vunpack.c.l.s4 1934713408
    %v253 = vunpack.c.0.s8 %v252
    %v254 = vperm.slane %v248, %v253
    %v256 = vunpack.c.l.s4 1934713408
    %v257 = vunpack.c.0.s8 %v256
    %v258 = vperm.slane %v250, %v257
    %v259 = vrot.slane %v242, 4
    %v260 = vsel %vm155, 0.0, %v259
    %v261 = vrot.slane %v246, 4
    %v262 = vsel %vm155, 0.0, %v261
    %v263 = vrot.slane %v254, 4
    %v264 = vsel %vm155, 0.0, %v263
    %v265 = vrot.slane %v258, 4
    %v266 = vsel %vm155, 0.0, %v265
    %v267 = vsel %vm155, %v205, %v186
    %v269 = vunpack.c.l.s4 1983009808
    %v270 = vunpack.c.0.s8 %v269
    %v271 = vperm.slane %v267, %v270
    %v272 = vrot.slane %v206, 4
    %v273 = vsel %vm155, %v272, %v204
    %v275 = vunpack.c.l.s4 1983009808
    %v276 = vunpack.c.0.s8 %v275
    %v277 = vperm.slane %v273, %v276
    %v278 = vsel %vm155, %v209, %v198
    %v280 = vunpack.c.l.s4 1983009808
    %v281 = vunpack.c.0.s8 %v280
    %v282 = vperm.slane %v278, %v281
    %v283 = vrot.slane %v210, 4
    %v284 = vsel %vm155, %v283, %v208
    %v286 = vunpack.c.l.s4 1983009808
    %v287 = vunpack.c.0.s8 %v286
    %v288 = vperm.slane %v284, %v287
    %v289 = vrot.slane %v277, 4
    %v290 = vsel %vm155, %v289, %v271
    %v291 = vrot.slane %v271, 4
    %v292 = vsel %vm155, %v277, %v291
    %v294 = vunpack.c.l.s4 1934713408
    %v295 = vunpack.c.0.s8 %v294
    %v296 = vperm.slane %v290, %v295
    %v298 = vunpack.c.l.s4 1934713408
    %v299 = vunpack.c.0.s8 %v298
    %v300 = vperm.slane %v292, %v299
    %v301 = vrot.slane %v288, 4
    %v302 = vsel %vm155, %v301, %v282
    %v303 = vrot.slane %v282, 4
    %v304 = vsel %vm155, %v288, %v303
    %v306 = vunpack.c.l.s4 1934713408
    %v307 = vunpack.c.0.s8 %v306
    %v308 = vperm.slane %v302, %v307
    %v310 = vunpack.c.l.s4 1934713408
    %v311 = vunpack.c.0.s8 %v310
    %v312 = vperm.slane %v304, %v311
    %v313 = vrot.slane %v308, 4
    %v314 = vsel %vm155, %v313, %v296
    %v315 = vrot.slane %v296, 4
    %v316 = vsel %vm155, %v308, %v315
    %v317 = vrot.slane %v312, 4
    %v318 = vsel %vm155, %v317, %v300
    %v319 = vrot.slane %v300, 4
    %v320 = vsel %vm155, %v312, %v319
    %v321 = vsel %vm155, %v261, %v242
    %v323 = vunpack.c.l.s4 1983009808
    %v324 = vunpack.c.0.s8 %v323
    %v325 = vperm.slane %v321, %v324
    %v326 = vrot.slane %v262, 4
    %v327 = vsel %vm155, %v326, %v260
    %v329 = vunpack.c.l.s4 1983009808
    %v330 = vunpack.c.0.s8 %v329
    %v331 = vperm.slane %v327, %v330
    %v332 = vsel %vm155, %v265, %v254
    %v334 = vunpack.c.l.s4 1983009808
    %v335 = vunpack.c.0.s8 %v334
    %v336 = vperm.slane %v332, %v335
    %v337 = vrot.slane %v266, 4
    %v338 = vsel %vm155, %v337, %v264
    %v340 = vunpack.c.l.s4 1983009808
    %v341 = vunpack.c.0.s8 %v340
    %v342 = vperm.slane %v338, %v341
    %v343 = vrot.slane %v331, 4
    %v344 = vsel %vm155, %v343, %v325
    %v345 = vrot.slane %v325, 4
    %v346 = vsel %vm155, %v331, %v345
    %v348 = vunpack.c.l.s4 1934713408
    %v349 = vunpack.c.0.s8 %v348
    %v350 = vperm.slane %v344, %v349
    %v352 = vunpack.c.l.s4 1934713408
    %v353 = vunpack.c.0.s8 %v352
    %v354 = vperm.slane %v346, %v353
    %v355 = vrot.slane %v342, 4
    %v356 = vsel %vm155, %v355, %v336
    %v357 = vrot.slane %v336, 4
    %v358 = vsel %vm155, %v342, %v357
    %v360 = vunpack.c.l.s4 1934713408
    %v361 = vunpack.c.0.s8 %v360
    %v362 = vperm.slane %v356, %v361
    %v364 = vunpack.c.l.s4 1934713408
    %v365 = vunpack.c.0.s8 %v364
    %v366 = vperm.slane %v358, %v365
    %v367 = vrot.slane %v362, 4
    %v368 = vsel %vm155, %v367, %v350
    %v369 = vrot.slane %v350, 4
    %v370 = vsel %vm155, %v362, %v369
    %v371 = vrot.slane %v366, 4
    %v372 = vsel %vm155, %v371, %v354
    %v373 = vrot.slane %v354, 4
    %v374 = vsel %vm155, %v366, %v373
    %375 = vrot.lane.b32.xlu0 %v129, 96
    %v376 = vpop.permute.xlu0 %375
    %377 = vrot.lane.b32.xlu0 %v132, 96
    %v378 = vpop.permute.xlu0 %377
    %379 = vrot.lane.b32.xlu0 %v137, 96
    %v380 = vpop.permute.xlu0 %379
    %381 = vrot.lane.b32.xlu0 %v139, 96
    %v382 = vpop.permute.xlu0 %381
    %383 = vrot.lane.b32.xlu0 %v143, 96
    %v384 = vpop.permute.xlu0 %383
    %385 = vrot.lane.b32.xlu0 %v145, 96
    %v386 = vpop.permute.xlu0 %385
    %387 = vrot.lane.b32.xlu0 %v149, 96
    %v388 = vpop.permute.xlu0 %387
    %389 = vrot.lane.b32.xlu0 %v151, 96
    %v390 = vpop.permute.xlu0 %389
    %v399 = vrot.slane %v384, 4
    %v400 = vsel %vm155, %v399, %v376
    %v401 = vrot.slane %v376, 4
    %v402 = vsel %vm155, %v384, %v401
    %v404 = vunpack.c.l.s4 1983009808
    %v405 = vunpack.c.0.s8 %v404
    %v406 = vperm.slane %v400, %v405
    %v408 = vunpack.c.l.s4 1983009808
    %v409 = vunpack.c.0.s8 %v408
    %v410 = vperm.slane %v402, %v409
    %v411 = vrot.slane %v388, 4
    %v412 = vsel %vm155, %v411, %v380
    %v413 = vrot.slane %v380, 4
    %v414 = vsel %vm155, %v388, %v413
    %v416 = vunpack.c.l.s4 1983009808
    %v417 = vunpack.c.0.s8 %v416
    %v418 = vperm.slane %v412, %v417
    %v420 = vunpack.c.l.s4 1983009808
    %v421 = vunpack.c.0.s8 %v420
    %v422 = vperm.slane %v414, %v421
    %v423 = vrot.slane %v418, 4
    %v424 = vsel %vm155, %v423, %v406
    %v425 = vrot.slane %v406, 4
    %v426 = vsel %vm155, %v418, %v425
    %v428 = vunpack.c.l.s4 1934713408
    %v429 = vunpack.c.0.s8 %v428
    %v430 = vperm.slane %v424, %v429
    %v432 = vunpack.c.l.s4 1934713408
    %v433 = vunpack.c.0.s8 %v432
    %v434 = vperm.slane %v426, %v433
    %v435 = vrot.slane %v422, 4
    %v436 = vsel %vm155, %v435, %v410
    %v437 = vrot.slane %v410, 4
    %v438 = vsel %vm155, %v422, %v437
    %v440 = vunpack.c.l.s4 1934713408
    %v441 = vunpack.c.0.s8 %v440
    %v442 = vperm.slane %v436, %v441
    %v444 = vunpack.c.l.s4 1934713408
    %v445 = vunpack.c.0.s8 %v444
    %v446 = vperm.slane %v438, %v445
    %v447 = vrot.slane %v430, 4
    %v448 = vsel %vm155, 0.0, %v447
    %v449 = vrot.slane %v434, 4
    %v450 = vsel %vm155, 0.0, %v449
    %v451 = vrot.slane %v442, 4
    %v452 = vsel %vm155, 0.0, %v451
    %v453 = vrot.slane %v446, 4
    %v454 = vsel %vm155, 0.0, %v453
    %v455 = vrot.slane %v386, 4
    %v456 = vsel %vm155, %v455, %v378
    %v457 = vrot.slane %v378, 4
    %v458 = vsel %vm155, %v386, %v457
    %v460 = vunpack.c.l.s4 1983009808
    %v461 = vunpack.c.0.s8 %v460
    %v462 = vperm.slane %v456, %v461
    %v464 = vunpack.c.l.s4 1983009808
    %v465 = vunpack.c.0.s8 %v464
    %v466 = vperm.slane %v458, %v465
    %v467 = vrot.slane %v390, 4
    %v468 = vsel %vm155, %v467, %v382
    %v469 = vrot.slane %v382, 4
    %v470 = vsel %vm155, %v390, %v469
    %v472 = vunpack.c.l.s4 1983009808
    %v473 = vunpack.c.0.s8 %v472
    %v474 = vperm.slane %v468, %v473
    %v476 = vunpack.c.l.s4 1983009808
    %v477 = vunpack.c.0.s8 %v476
    %v478 = vperm.slane %v470, %v477
    %v479 = vrot.slane %v474, 4
    %v480 = vsel %vm155, %v479, %v462
    %v481 = vrot.slane %v462, 4
    %v482 = vsel %vm155, %v474, %v481
    %v484 = vunpack.c.l.s4 1934713408
    %v485 = vunpack.c.0.s8 %v484
    %v486 = vperm.slane %v480, %v485
    %v488 = vunpack.c.l.s4 1934713408
    %v489 = vunpack.c.0.s8 %v488
    %v490 = vperm.slane %v482, %v489
    %v491 = vrot.slane %v478, 4
    %v492 = vsel %vm155, %v491, %v466
    %v493 = vrot.slane %v466, 4
    %v494 = vsel %vm155, %v478, %v493
    %v496 = vunpack.c.l.s4 1934713408
    %v497 = vunpack.c.0.s8 %v496
    %v498 = vperm.slane %v492, %v497
    %v500 = vunpack.c.l.s4 1934713408
    %v501 = vunpack.c.0.s8 %v500
    %v502 = vperm.slane %v494, %v501
    %v503 = vrot.slane %v486, 4
    %v504 = vsel %vm155, 0.0, %v503
    %v505 = vrot.slane %v490, 4
    %v506 = vsel %vm155, 0.0, %v505
    %v507 = vrot.slane %v498, 4
    %v508 = vsel %vm155, 0.0, %v507
    %v509 = vrot.slane %v502, 4
    %v510 = vsel %vm155, 0.0, %v509
    %v511 = vsel %vm155, %v449, %v430
    %v513 = vunpack.c.l.s4 1983009808
    %v514 = vunpack.c.0.s8 %v513
    %v515 = vperm.slane %v511, %v514
    %v516 = vrot.slane %v450, 4
    %v517 = vsel %vm155, %v516, %v448
    %v519 = vunpack.c.l.s4 1983009808
    %v520 = vunpack.c.0.s8 %v519
    %v521 = vperm.slane %v517, %v520
    %v522 = vsel %vm155, %v453, %v442
    %v524 = vunpack.c.l.s4 1983009808
    %v525 = vunpack.c.0.s8 %v524
    %v526 = vperm.slane %v522, %v525
    %v527 = vrot.slane %v454, 4
    %v528 = vsel %vm155, %v527, %v452
    %v530 = vunpack.c.l.s4 1983009808
    %v531 = vunpack.c.0.s8 %v530
    %v532 = vperm.slane %v528, %v531
    %v533 = vrot.slane %v521, 4
    %v534 = vsel %vm155, %v533, %v515
    %v535 = vrot.slane %v515, 4
    %v536 = vsel %vm155, %v521, %v535
    %v538 = vunpack.c.l.s4 1934713408
    %v539 = vunpack.c.0.s8 %v538
    %v540 = vperm.slane %v534, %v539
    %v542 = vunpack.c.l.s4 1934713408
    %v543 = vunpack.c.0.s8 %v542
    %v544 = vperm.slane %v536, %v543
    %v545 = vrot.slane %v532, 4
    %v546 = vsel %vm155, %v545, %v526
    %v547 = vrot.slane %v526, 4
    %v548 = vsel %vm155, %v532, %v547
    %v550 = vunpack.c.l.s4 1934713408
    %v551 = vunpack.c.0.s8 %v550
    %v552 = vperm.slane %v546, %v551
    %v554 = vunpack.c.l.s4 1934713408
    %v555 = vunpack.c.0.s8 %v554
    %v556 = vperm.slane %v548, %v555
    %v557 = vrot.slane %v552, 4
    %v558 = vsel %vm155, %v557, %v540
    %v559 = vrot.slane %v540, 4
    %v560 = vsel %vm155, %v552, %v559
    %v561 = vrot.slane %v556, 4
    %v562 = vsel %vm155, %v561, %v544
    %v563 = vrot.slane %v544, 4
    %v564 = vsel %vm155, %v556, %v563
    %v565 = vsel %vm155, %v505, %v486
    %v567 = vunpack.c.l.s4 1983009808
    %v568 = vunpack.c.0.s8 %v567
    %v569 = vperm.slane %v565, %v568
    %v570 = vrot.slane %v506, 4
    %v571 = vsel %vm155, %v570, %v504
    %v573 = vunpack.c.l.s4 1983009808
    %v574 = vunpack.c.0.s8 %v573
    %v575 = vperm.slane %v571, %v574
    %v576 = vsel %vm155, %v509, %v498
    %v578 = vunpack.c.l.s4 1983009808
    %v579 = vunpack.c.0.s8 %v578
    %v580 = vperm.slane %v576, %v579
    %v581 = vrot.slane %v510, 4
    %v582 = vsel %vm155, %v581, %v508
    %v584 = vunpack.c.l.s4 1983009808
    %v585 = vunpack.c.0.s8 %v584
    %v586 = vperm.slane %v582, %v585
    %v587 = vrot.slane %v575, 4
    %v588 = vsel %vm155, %v587, %v569
    %v589 = vrot.slane %v569, 4
    %v590 = vsel %vm155, %v575, %v589
    %v592 = vunpack.c.l.s4 1934713408
    %v593 = vunpack.c.0.s8 %v592
    %v594 = vperm.slane %v588, %v593
    %v596 = vunpack.c.l.s4 1934713408
    %v597 = vunpack.c.0.s8 %v596
    %v598 = vperm.slane %v590, %v597
    %v599 = vrot.slane %v586, 4
    %v600 = vsel %vm155, %v599, %v580
    %v601 = vrot.slane %v580, 4
    %v602 = vsel %vm155, %v586, %v601
    %v604 = vunpack.c.l.s4 1934713408
    %v605 = vunpack.c.0.s8 %v604
    %v606 = vperm.slane %v600, %v605
    %v608 = vunpack.c.l.s4 1934713408
    %v609 = vunpack.c.0.s8 %v608
    %v610 = vperm.slane %v602, %v609
    %v611 = vrot.slane %v606, 4
    %v612 = vsel %vm155, %v611, %v594
    %v613 = vrot.slane %v594, 4
    %v614 = vsel %vm155, %v606, %v613
    %v615 = vrot.slane %v610, 4
    %v616 = vsel %vm155, %v615, %v598
    %v617 = vrot.slane %v598, 4
    %v618 = vsel %vm155, %v610, %v617
    %619 = vrot.lane.b32.xlu0 %v129, 64
    %v620 = vpop.permute.xlu0 %619
    %621 = vrot.lane.b32.xlu0 %v132, 64
    %v622 = vpop.permute.xlu0 %621
    %623 = vrot.lane.b32.xlu0 %v137, 64
    %v624 = vpop.permute.xlu0 %623
    %625 = vrot.lane.b32.xlu0 %v139, 64
    %v626 = vpop.permute.xlu0 %625
    %627 = vrot.lane.b32.xlu0 %v143, 64
    %v628 = vpop.permute.xlu0 %627
    %629 = vrot.lane.b32.xlu0 %v145, 64
    %v630 = vpop.permute.xlu0 %629
    %631 = vrot.lane.b32.xlu0 %v149, 64
    %v632 = vpop.permute.xlu0 %631
    %633 = vrot.lane.b32.xlu0 %v151, 64
    %v634 = vpop.permute.xlu0 %633
    %v643 = vrot.slane %v628, 4
    %v644 = vsel %vm155, %v643, %v620
    %v645 = vrot.slane %v620, 4
    %v646 = vsel %vm155, %v628, %v645
    %v648 = vunpack.c.l.s4 1983009808
    %v649 = vunpack.c.0.s8 %v648
    %v650 = vperm.slane %v644, %v649
    %v652 = vunpack.c.l.s4 1983009808
    %v653 = vunpack.c.0.s8 %v652
    %v654 = vperm.slane %v646, %v653
    %v655 = vrot.slane %v632, 4
    %v656 = vsel %vm155, %v655, %v624
    %v657 = vrot.slane %v624, 4
    %v658 = vsel %vm155, %v632, %v657
    %v660 = vunpack.c.l.s4 1983009808
    %v661 = vunpack.c.0.s8 %v660
    %v662 = vperm.slane %v656, %v661
    %v664 = vunpack.c.l.s4 1983009808
    %v665 = vunpack.c.0.s8 %v664
    %v666 = vperm.slane %v658, %v665
    %v667 = vrot.slane %v662, 4
    %v668 = vsel %vm155, %v667, %v650
    %v669 = vrot.slane %v650, 4
    %v670 = vsel %vm155, %v662, %v669
    %v672 = vunpack.c.l.s4 1934713408
    %v673 = vunpack.c.0.s8 %v672
    %v674 = vperm.slane %v668, %v673
    %v676 = vunpack.c.l.s4 1934713408
    %v677 = vunpack.c.0.s8 %v676
    %v678 = vperm.slane %v670, %v677
    %v679 = vrot.slane %v666, 4
    %v680 = vsel %vm155, %v679, %v654
    %v681 = vrot.slane %v654, 4
    %v682 = vsel %vm155, %v666, %v681
    %v684 = vunpack.c.l.s4 1934713408
    %v685 = vunpack.c.0.s8 %v684
    %v686 = vperm.slane %v680, %v685
    %v688 = vunpack.c.l.s4 1934713408
    %v689 = vunpack.c.0.s8 %v688
    %v690 = vperm.slane %v682, %v689
    %v691 = vrot.slane %v674, 4
    %v692 = vsel %vm155, 0.0, %v691
    %v693 = vrot.slane %v678, 4
    %v694 = vsel %vm155, 0.0, %v693
    %v695 = vrot.slane %v686, 4
    %v696 = vsel %vm155, 0.0, %v695
    %v697 = vrot.slane %v690, 4
    %v698 = vsel %vm155, 0.0, %v697
    %v699 = vrot.slane %v630, 4
    %v700 = vsel %vm155, %v699, %v622
    %v701 = vrot.slane %v622, 4
    %v702 = vsel %vm155, %v630, %v701
    %v704 = vunpack.c.l.s4 1983009808
    %v705 = vunpack.c.0.s8 %v704
    %v706 = vperm.slane %v700, %v705
    %v708 = vunpack.c.l.s4 1983009808
    %v709 = vunpack.c.0.s8 %v708
    %v710 = vperm.slane %v702, %v709
    %v711 = vrot.slane %v634, 4
    %v712 = vsel %vm155, %v711, %v626
    %v713 = vrot.slane %v626, 4
    %v714 = vsel %vm155, %v634, %v713
    %v716 = vunpack.c.l.s4 1983009808
    %v717 = vunpack.c.0.s8 %v716
    %v718 = vperm.slane %v712, %v717
    %v720 = vunpack.c.l.s4 1983009808
    %v721 = vunpack.c.0.s8 %v720
    %v722 = vperm.slane %v714, %v721
    %v723 = vrot.slane %v718, 4
    %v724 = vsel %vm155, %v723, %v706
    %v725 = vrot.slane %v706, 4
    %v726 = vsel %vm155, %v718, %v725
    %v728 = vunpack.c.l.s4 1934713408
    %v729 = vunpack.c.0.s8 %v728
    %v730 = vperm.slane %v724, %v729
    %v732 = vunpack.c.l.s4 1934713408
    %v733 = vunpack.c.0.s8 %v732
    %v734 = vperm.slane %v726, %v733
    %v735 = vrot.slane %v722, 4
    %v736 = vsel %vm155, %v735, %v710
    %v737 = vrot.slane %v710, 4
    %v738 = vsel %vm155, %v722, %v737
    %v740 = vunpack.c.l.s4 1934713408
    %v741 = vunpack.c.0.s8 %v740
    %v742 = vperm.slane %v736, %v741
    %v744 = vunpack.c.l.s4 1934713408
    %v745 = vunpack.c.0.s8 %v744
    %v746 = vperm.slane %v738, %v745
    %v747 = vrot.slane %v730, 4
    %v748 = vsel %vm155, 0.0, %v747
    %v749 = vrot.slane %v734, 4
    %v750 = vsel %vm155, 0.0, %v749
    %v751 = vrot.slane %v742, 4
    %v752 = vsel %vm155, 0.0, %v751
    %v753 = vrot.slane %v746, 4
    %v754 = vsel %vm155, 0.0, %v753
    %v755 = vsel %vm155, %v693, %v674
    %v757 = vunpack.c.l.s4 1983009808
    %v758 = vunpack.c.0.s8 %v757
    %v759 = vperm.slane %v755, %v758
    %v760 = vrot.slane %v694, 4
    %v761 = vsel %vm155, %v760, %v692
    %v763 = vunpack.c.l.s4 1983009808
    %v764 = vunpack.c.0.s8 %v763
    %v765 = vperm.slane %v761, %v764
    %v766 = vsel %vm155, %v697, %v686
    %v768 = vunpack.c.l.s4 1983009808
    %v769 = vunpack.c.0.s8 %v768
    %v770 = vperm.slane %v766, %v769
    %v771 = vrot.slane %v698, 4
    %v772 = vsel %vm155, %v771, %v696
    %v774 = vunpack.c.l.s4 1983009808
    %v775 = vunpack.c.0.s8 %v774
    %v776 = vperm.slane %v772, %v775
    %v777 = vrot.slane %v765, 4
    %v778 = vsel %vm155, %v777, %v759
    %v779 = vrot.slane %v759, 4
    %v780 = vsel %vm155, %v765, %v779
    %v782 = vunpack.c.l.s4 1934713408
    %v783 = vunpack.c.0.s8 %v782
    %v784 = vperm.slane %v778, %v783
    %v786 = vunpack.c.l.s4 1934713408
    %v787 = vunpack.c.0.s8 %v786
    %v788 = vperm.slane %v780, %v787
    %v789 = vrot.slane %v776, 4
    %v790 = vsel %vm155, %v789, %v770
    %v791 = vrot.slane %v770, 4
    %v792 = vsel %vm155, %v776, %v791
    %v794 = vunpack.c.l.s4 1934713408
    %v795 = vunpack.c.0.s8 %v794
    %v796 = vperm.slane %v790, %v795
    %v798 = vunpack.c.l.s4 1934713408
    %v799 = vunpack.c.0.s8 %v798
    %v800 = vperm.slane %v792, %v799
    %v801 = vrot.slane %v796, 4
    %v802 = vsel %vm155, %v801, %v784
    %v803 = vrot.slane %v784, 4
    %v804 = vsel %vm155, %v796, %v803
    %v805 = vrot.slane %v800, 4
    %v806 = vsel %vm155, %v805, %v788
    %v807 = vrot.slane %v788, 4
    %v808 = vsel %vm155, %v800, %v807
    %v809 = vsel %vm155, %v749, %v730
    %v811 = vunpack.c.l.s4 1983009808
    %v812 = vunpack.c.0.s8 %v811
    %v813 = vperm.slane %v809, %v812
    %v814 = vrot.slane %v750, 4
    %v815 = vsel %vm155, %v814, %v748
    %v817 = vunpack.c.l.s4 1983009808
    %v818 = vunpack.c.0.s8 %v817
    %v819 = vperm.slane %v815, %v818
    %v820 = vsel %vm155, %v753, %v742
    %v822 = vunpack.c.l.s4 1983009808
    %v823 = vunpack.c.0.s8 %v822
    %v824 = vperm.slane %v820, %v823
    %v825 = vrot.slane %v754, 4
    %v826 = vsel %vm155, %v825, %v752
    %v828 = vunpack.c.l.s4 1983009808
    %v829 = vunpack.c.0.s8 %v828
    %v830 = vperm.slane %v826, %v829
    %v831 = vrot.slane %v819, 4
    %v832 = vsel %vm155, %v831, %v813
    %v833 = vrot.slane %v813, 4
    %v834 = vsel %vm155, %v819, %v833
    %v836 = vunpack.c.l.s4 1934713408
    %v837 = vunpack.c.0.s8 %v836
    %v838 = vperm.slane %v832, %v837
    %v840 = vunpack.c.l.s4 1934713408
    %v841 = vunpack.c.0.s8 %v840
    %v842 = vperm.slane %v834, %v841
    %v843 = vrot.slane %v830, 4
    %v844 = vsel %vm155, %v843, %v824
    %v845 = vrot.slane %v824, 4
    %v846 = vsel %vm155, %v830, %v845
    %v848 = vunpack.c.l.s4 1934713408
    %v849 = vunpack.c.0.s8 %v848
    %v850 = vperm.slane %v844, %v849
    %v852 = vunpack.c.l.s4 1934713408
    %v853 = vunpack.c.0.s8 %v852
    %v854 = vperm.slane %v846, %v853
    %v855 = vrot.slane %v850, 4
    %v856 = vsel %vm155, %v855, %v838
    %v857 = vrot.slane %v838, 4
    %v858 = vsel %vm155, %v850, %v857
    %v859 = vrot.slane %v854, 4
    %v860 = vsel %vm155, %v859, %v842
    %v861 = vrot.slane %v842, 4
    %v862 = vsel %vm155, %v854, %v861
    %vm863 = vcmask 64512
    %v865 = vsel %vm863, %v314, 0
    %v868 = vsel %vm863, %v558, 0
    %870 = vmatpush.xpose.msra.mxu0 0.0
    %871 = vmatpush.xpose.msra.mxu0 0.0
    %872 = vmatpush.xpose.msra.mxu0 0.0
    %873 = vmatpush.xpose.msra.mxu0 0.0
    %874 = vmatpush.xpose.msra.mxu0 0.0
    %875 = vmatpush.xpose.msra.mxu0 0.0
    %876 = vmatpush.xpose.msra.mxu0 0.0
    %877 = vmatpush.xpose.msra.mxu0 0.0
    %878 = vmatpush.xpose.msra.mxu0 0.0
    %879 = vmatpush.xpose.msra.mxu0 0.0
    %880 = vmatpush.xpose.msra.mxu0 0.0
    %881 = vmatpush.xpose.msra.mxu0 0.0
    %882 = vmatpush.xpose.msra.mxu0 0.0
    %883 = vmatpush.xpose.msra.mxu0 0.0
    %884 = vmatpush.xpose.msra.mxu0 0.0
    %885 = vmatpush.xpose.msra.mxu0 %v868
    %886 = vmatmul.f32.gmra.mxu0 %v865
    %v887 = vpop.f32.mrf.mxu0
    %v888 = vadd.f32 0.0, %v887
    %889 = vdwg.mxu0
    %v891 = vsel %vm863, %v316, 0
    %v894 = vsel %vm863, %v560, 0
    %896 = vmatpush.xpose.msra.mxu0 0.0
    %897 = vmatpush.xpose.msra.mxu0 0.0
    %898 = vmatpush.xpose.msra.mxu0 0.0
    %899 = vmatpush.xpose.msra.mxu0 0.0
    %900 = vmatpush.xpose.msra.mxu0 0.0
    %901 = vmatpush.xpose.msra.mxu0 0.0
    %902 = vmatpush.xpose.msra.mxu0 0.0
    %903 = vmatpush.xpose.msra.mxu0 0.0
    %904 = vmatpush.xpose.msra.mxu0 0.0
    %905 = vmatpush.xpose.msra.mxu0 0.0
    %906 = vmatpush.xpose.msra.mxu0 0.0
    %907 = vmatpush.xpose.msra.mxu0 0.0
    %908 = vmatpush.xpose.msra.mxu0 0.0
    %909 = vmatpush.xpose.msra.mxu0 0.0
    %910 = vmatpush.xpose.msra.mxu0 0.0
    %911 = vmatpush.xpose.msra.mxu0 %v894
    %912 = vmatmul.f32.gmra.mxu0 %v891
    %v913 = vpop.f32.mrf.mxu0
    %v914 = vadd.f32 0.0, %v913
    %915 = vdwg.mxu0
    %v917 = vsel %vm863, %v318, 0
    %v920 = vsel %vm863, %v562, 0
    %922 = vmatpush.xpose.msra.mxu0 0.0
    %923 = vmatpush.xpose.msra.mxu0 0.0
    %924 = vmatpush.xpose.msra.mxu0 0.0
    %925 = vmatpush.xpose.msra.mxu0 0.0
    %926 = vmatpush.xpose.msra.mxu0 0.0
    %927 = vmatpush.xpose.msra.mxu0 0.0
    %928 = vmatpush.xpose.msra.mxu0 0.0
    %929 = vmatpush.xpose.msra.mxu0 0.0
    %930 = vmatpush.xpose.msra.mxu0 0.0
    %931 = vmatpush.xpose.msra.mxu0 0.0
    %932 = vmatpush.xpose.msra.mxu0 0.0
    %933 = vmatpush.xpose.msra.mxu0 0.0
    %934 = vmatpush.xpose.msra.mxu0 0.0
    %935 = vmatpush.xpose.msra.mxu0 0.0
    %936 = vmatpush.xpose.msra.mxu0 0.0
    %937 = vmatpush.xpose.msra.mxu0 %v920
    %938 = vmatmul.f32.gmra.mxu0 %v917
    %v939 = vpop.f32.mrf.mxu0
    %v940 = vadd.f32 0.0, %v939
    %941 = vdwg.mxu0
    %v943 = vsel %vm863, %v320, 0
    %v946 = vsel %vm863, %v564, 0
    %948 = vmatpush.xpose.msra.mxu0 0.0
    %949 = vmatpush.xpose.msra.mxu0 0.0
    %950 = vmatpush.xpose.msra.mxu0 0.0
    %951 = vmatpush.xpose.msra.mxu0 0.0
    %952 = vmatpush.xpose.msra.mxu0 0.0
    %953 = vmatpush.xpose.msra.mxu0 0.0
    %954 = vmatpush.xpose.msra.mxu0 0.0
    %955 = vmatpush.xpose.msra.mxu0 0.0
    %956 = vmatpush.xpose.msra.mxu0 0.0
    %957 = vmatpush.xpose.msra.mxu0 0.0
    %958 = vmatpush.xpose.msra.mxu0 0.0
    %959 = vmatpush.xpose.msra.mxu0 0.0
    %960 = vmatpush.xpose.msra.mxu0 0.0
    %961 = vmatpush.xpose.msra.mxu0 0.0
    %962 = vmatpush.xpose.msra.mxu0 0.0
    %963 = vmatpush.xpose.msra.mxu0 %v946
    %964 = vmatmul.f32.gmra.mxu0 %v943
    %v965 = vpop.f32.mrf.mxu0
    %v966 = vadd.f32 0.0, %v965
    %967 = vdwg.mxu0
    %v969 = vsel %vm863, %v368, 0
    %v972 = vsel %vm863, %v612, 0
    %974 = vmatpush.xpose.msra.mxu0 0.0
    %975 = vmatpush.xpose.msra.mxu0 0.0
    %976 = vmatpush.xpose.msra.mxu0 0.0
    %977 = vmatpush.xpose.msra.mxu0 0.0
    %978 = vmatpush.xpose.msra.mxu0 0.0
    %979 = vmatpush.xpose.msra.mxu0 0.0
    %980 = vmatpush.xpose.msra.mxu0 0.0
    %981 = vmatpush.xpose.msra.mxu0 0.0
    %982 = vmatpush.xpose.msra.mxu0 0.0
    %983 = vmatpush.xpose.msra.mxu0 0.0
    %984 = vmatpush.xpose.msra.mxu0 0.0
    %985 = vmatpush.xpose.msra.mxu0 0.0
    %986 = vmatpush.xpose.msra.mxu0 0.0
    %987 = vmatpush.xpose.msra.mxu0 0.0
    %988 = vmatpush.xpose.msra.mxu0 0.0
    %989 = vmatpush.xpose.msra.mxu0 %v972
    %990 = vmatmul.f32.gmra.mxu0 %v969
    %v991 = vpop.f32.mrf.mxu0
    %v992 = vadd.f32 0.0, %v991
    %993 = vdwg.mxu0
    %v995 = vsel %vm863, %v370, 0
    %v998 = vsel %vm863, %v614, 0
    %1000 = vmatpush.xpose.msra.mxu0 0.0
    %1001 = vmatpush.xpose.msra.mxu0 0.0
    %1002 = vmatpush.xpose.msra.mxu0 0.0
    %1003 = vmatpush.xpose.msra.mxu0 0.0
    %1004 = vmatpush.xpose.msra.mxu0 0.0
    %1005 = vmatpush.xpose.msra.mxu0 0.0
    %1006 = vmatpush.xpose.msra.mxu0 0.0
    %1007 = vmatpush.xpose.msra.mxu0 0.0
    %1008 = vmatpush.xpose.msra.mxu0 0.0
    %1009 = vmatpush.xpose.msra.mxu0 0.0
    %1010 = vmatpush.xpose.msra.mxu0 0.0
    %1011 = vmatpush.xpose.msra.mxu0 0.0
    %1012 = vmatpush.xpose.msra.mxu0 0.0
    %1013 = vmatpush.xpose.msra.mxu0 0.0
    %1014 = vmatpush.xpose.msra.mxu0 0.0
    %1015 = vmatpush.xpose.msra.mxu0 %v998
    %1016 = vmatmul.f32.gmra.mxu0 %v995
    %v1017 = vpop.f32.mrf.mxu0
    %v1018 = vadd.f32 0.0, %v1017
    %1019 = vdwg.mxu0
    %v1021 = vsel %vm863, %v372, 0
    %v1024 = vsel %vm863, %v616, 0
    %1026 = vmatpush.xpose.msra.mxu0 0.0
    %1027 = vmatpush.xpose.msra.mxu0 0.0
    %1028 = vmatpush.xpose.msra.mxu0 0.0
    %1029 = vmatpush.xpose.msra.mxu0 0.0
    %1030 = vmatpush.xpose.msra.mxu0 0.0
    %1031 = vmatpush.xpose.msra.mxu0 0.0
    %1032 = vmatpush.xpose.msra.mxu0 0.0
    %1033 = vmatpush.xpose.msra.mxu0 0.0
    %1034 = vmatpush.xpose.msra.mxu0 0.0
    %1035 = vmatpush.xpose.msra.mxu0 0.0
    %1036 = vmatpush.xpose.msra.mxu0 0.0
    %1037 = vmatpush.xpose.msra.mxu0 0.0
    %1038 = vmatpush.xpose.msra.mxu0 0.0
    %1039 = vmatpush.xpose.msra.mxu0 0.0
    %1040 = vmatpush.xpose.msra.mxu0 0.0
    %1041 = vmatpush.xpose.msra.mxu0 %v1024
    %1042 = vmatmul.f32.gmra.mxu0 %v1021
    %v1043 = vpop.f32.mrf.mxu0
    %v1044 = vadd.f32 0.0, %v1043
    %1045 = vdwg.mxu0
    %v1047 = vsel %vm863, %v374, 0
    %v1050 = vsel %vm863, %v618, 0
    %1052 = vmatpush.xpose.msra.mxu0 0.0
    %1053 = vmatpush.xpose.msra.mxu0 0.0
    %1054 = vmatpush.xpose.msra.mxu0 0.0
    %1055 = vmatpush.xpose.msra.mxu0 0.0
    %1056 = vmatpush.xpose.msra.mxu0 0.0
    %1057 = vmatpush.xpose.msra.mxu0 0.0
    %1058 = vmatpush.xpose.msra.mxu0 0.0
    %1059 = vmatpush.xpose.msra.mxu0 0.0
    %1060 = vmatpush.xpose.msra.mxu0 0.0
    %1061 = vmatpush.xpose.msra.mxu0 0.0
    %1062 = vmatpush.xpose.msra.mxu0 0.0
    %1063 = vmatpush.xpose.msra.mxu0 0.0
    %1064 = vmatpush.xpose.msra.mxu0 0.0
    %1065 = vmatpush.xpose.msra.mxu0 0.0
    %1066 = vmatpush.xpose.msra.mxu0 0.0
    %1067 = vmatpush.xpose.msra.mxu0 %v1050
    %1068 = vmatmul.f32.gmra.mxu0 %v1047
    %v1069 = vpop.f32.mrf.mxu0
    %v1070 = vadd.f32 0.0, %v1069
    %1071 = vdwg.mxu0
    %v1072 = vlaneseq
    %v1073 = vshrl.u32 %v1072, 7
    %v1074 = vlaneseq
    %v1075 = vand.u32 %v1074, 127
    %vm1076 = vcmp.eq.s32.totalorder %v1073, %v1075
    %v1077 = vsel %vm1076, 1, 0
    %vm1078 = vcmp.eq.s32.totalorder %v1077, 1
    %v1079 = vsel %vm1078, -1e+30, %v888
    %v1080 = vsel %vm1078, -1e+30, %v914
    %v1081 = vsel %vm1078, -1e+30, %v940
    %v1082 = vsel %vm1078, -1e+30, %v966
    %v1083 = vsel %vm1078, -1e+30, %v992
    %v1084 = vsel %vm1078, -1e+30, %v1018
    %v1085 = vsel %vm1078, -1e+30, %v1044
    %v1086 = vsel %vm1078, -1e+30, %v1070
    %v1087 = vsel %vm863, %v1079, -inf
    %1088 = vmax.xlane.f32.xlu0 %v1087
    %v1089 = vpop.xlane.xlu0 %1088
    %v1090 = vsel %vm863, %v1080, -inf
    %1091 = vmax.xlane.f32.xlu0 %v1090
    %v1092 = vpop.xlane.xlu0 %1091
    %v1093 = vsel %vm863, %v1081, -inf
    %1094 = vmax.xlane.f32.xlu0 %v1093
    %v1095 = vpop.xlane.xlu0 %1094
    %v1096 = vsel %vm863, %v1082, -inf
    %1097 = vmax.xlane.f32.xlu0 %v1096
    %v1098 = vpop.xlane.xlu0 %1097
    %v1099 = vsel %vm863, %v1083, -inf
    %1100 = vmax.xlane.f32.xlu0 %v1099
    %v1101 = vpop.xlane.xlu0 %1100
    %v1102 = vsel %vm863, %v1084, -inf
    %1103 = vmax.xlane.f32.xlu0 %v1102
    %v1104 = vpop.xlane.xlu0 %1103
    %v1105 = vsel %vm863, %v1085, -inf
    %1106 = vmax.xlane.f32.xlu0 %v1105
    %v1107 = vpop.xlane.xlu0 %1106
    %v1108 = vsel %vm863, %v1086, -inf
    %1109 = vmax.xlane.f32.xlu0 %v1108
    %v1110 = vpop.xlane.xlu0 %1109
    %v1111 = vsub.f32 %v1079, %v1089
    %v1112 = vsub.f32 %v1080, %v1092
    %v1113 = vsub.f32 %v1081, %v1095
    %v1114 = vsub.f32 %v1082, %v1098
    %v1115 = vsub.f32 %v1083, %v1101
    %v1116 = vsub.f32 %v1084, %v1104
    %v1117 = vsub.f32 %v1085, %v1107
    %v1118 = vsub.f32 %v1086, %v1110
    %v1119 = vmul.f32 %v1111, 1.442695
    %v1120 = vpow.pop %v1119
    %v1121 = vmul.f32 %v1112, 1.442695
    %v1122 = vpow.pop %v1121
    %v1123 = vmul.f32 %v1113, 1.442695
    %v1124 = vpow.pop %v1123
    %v1125 = vmul.f32 %v1114, 1.442695
    %v1126 = vpow.pop %v1125
    %v1127 = vmul.f32 %v1115, 1.442695
    %v1128 = vpow.pop %v1127
    %v1129 = vmul.f32 %v1116, 1.442695
    %v1130 = vpow.pop %v1129
    %v1131 = vmul.f32 %v1117, 1.442695
    %v1132 = vpow.pop %v1131
    %v1133 = vmul.f32 %v1118, 1.442695
    %v1134 = vpow.pop %v1133
    %v1135 = vsel %vm863, %v1120, 0.0
    %1136 = vadd.xlane.f32.xlu0 %v1135
    %v1137 = vpop.xlane.xlu0 %1136
    %v1138 = vsel %vm863, %v1122, 0.0
    %1139 = vadd.xlane.f32.xlu0 %v1138
    %v1140 = vpop.xlane.xlu0 %1139
    %v1141 = vsel %vm863, %v1124, 0.0
    %1142 = vadd.xlane.f32.xlu0 %v1141
    %v1143 = vpop.xlane.xlu0 %1142
    %v1144 = vsel %vm863, %v1126, 0.0
    %1145 = vadd.xlane.f32.xlu0 %v1144
    %v1146 = vpop.xlane.xlu0 %1145
    %v1147 = vsel %vm863, %v1128, 0.0
    %1148 = vadd.xlane.f32.xlu0 %v1147
    %v1149 = vpop.xlane.xlu0 %1148
    %v1150 = vsel %vm863, %v1130, 0.0
    %1151 = vadd.xlane.f32.xlu0 %v1150
    %v1152 = vpop.xlane.xlu0 %1151
    %v1153 = vsel %vm863, %v1132, 0.0
    %1154 = vadd.xlane.f32.xlu0 %v1153
    %v1155 = vpop.xlane.xlu0 %1154
    %v1156 = vsel %vm863, %v1134, 0.0
    %1157 = vadd.xlane.f32.xlu0 %v1156
    %v1158 = vpop.xlane.xlu0 %1157
    %v1159 = vrcp.pop %v1137
    %v1160 = vrcp.pop %v1140
    %v1161 = vrcp.pop %v1143
    %v1162 = vrcp.pop %v1146
    %v1163 = vrcp.pop %v1149
    %v1164 = vrcp.pop %v1152
    %v1165 = vrcp.pop %v1155
    %v1166 = vrcp.pop %v1158
    %v1167 = vmul.f32 %v1120, %v1159
    %v1168 = vmul.f32 %v1122, %v1160
    %v1169 = vmul.f32 %v1124, %v1161
    %v1170 = vmul.f32 %v1126, %v1162
    %v1171 = vmul.f32 %v1128, %v1163
    %v1172 = vmul.f32 %v1130, %v1164
    %v1173 = vmul.f32 %v1132, %v1165
    %v1174 = vmul.f32 %v1134, %v1166
    %v1176 = vsel %vm863, %v1167, 0
    %1178 = vmatpush.msra.mxu0 0.0
    %1179 = vmatpush.msra.mxu0 0.0
    %1180 = vmatpush.msra.mxu0 0.0
    %1181 = vmatpush.msra.mxu0 0.0
    %1182 = vmatpush.msra.mxu0 0.0
    %1183 = vmatpush.msra.mxu0 0.0
    %1184 = vmatpush.msra.mxu0 0.0
    %1185 = vmatpush.msra.mxu0 0.0
    %1186 = vmatpush.msra.mxu0 0.0
    %1187 = vmatpush.msra.mxu0 0.0
    %1188 = vmatpush.msra.mxu0 0.0
    %1189 = vmatpush.msra.mxu0 0.0
    %1190 = vmatpush.msra.mxu0 0.0
    %1191 = vmatpush.msra.mxu0 0.0
    %1192 = vmatpush.msra.mxu0 0.0
    %1193 = vmatpush.msra.mxu0 %v802
    %1194 = vmatmul.f32.gmra.mxu0 %v1176
    %v1195 = vpop.f32.mrf.mxu0
    %v1196 = vadd.f32 0.0, %v1195
    %1197 = vdwg.mxu0
    %v1199 = vsel %vm863, %v1168, 0
    %1201 = vmatpush.msra.mxu0 0.0
    %1202 = vmatpush.msra.mxu0 0.0
    %1203 = vmatpush.msra.mxu0 0.0
    %1204 = vmatpush.msra.mxu0 0.0
    %1205 = vmatpush.msra.mxu0 0.0
    %1206 = vmatpush.msra.mxu0 0.0
    %1207 = vmatpush.msra.mxu0 0.0
    %1208 = vmatpush.msra.mxu0 0.0
    %1209 = vmatpush.msra.mxu0 0.0
    %1210 = vmatpush.msra.mxu0 0.0
    %1211 = vmatpush.msra.mxu0 0.0
    %1212 = vmatpush.msra.mxu0 0.0
    %1213 = vmatpush.msra.mxu0 0.0
    %1214 = vmatpush.msra.mxu0 0.0
    %1215 = vmatpush.msra.mxu0 0.0
    %1216 = vmatpush.msra.mxu0 %v804
    %1217 = vmatmul.f32.gmra.mxu0 %v1199
    %v1218 = vpop.f32.mrf.mxu0
    %v1219 = vadd.f32 0.0, %v1218
    %1220 = vdwg.mxu0
    %v1222 = vsel %vm863, %v1169, 0
    %1224 = vmatpush.msra.mxu0 0.0
    %1225 = vmatpush.msra.mxu0 0.0
    %1226 = vmatpush.msra.mxu0 0.0
    %1227 = vmatpush.msra.mxu0 0.0
    %1228 = vmatpush.msra.mxu0 0.0
    %1229 = vmatpush.msra.mxu0 0.0
    %1230 = vmatpush.msra.mxu0 0.0
    %1231 = vmatpush.msra.mxu0 0.0
    %1232 = vmatpush.msra.mxu0 0.0
    %1233 = vmatpush.msra.mxu0 0.0
    %1234 = vmatpush.msra.mxu0 0.0
    %1235 = vmatpush.msra.mxu0 0.0
    %1236 = vmatpush.msra.mxu0 0.0
    %1237 = vmatpush.msra.mxu0 0.0
    %1238 = vmatpush.msra.mxu0 0.0
    %1239 = vmatpush.msra.mxu0 %v806
    %1240 = vmatmul.f32.gmra.mxu0 %v1222
    %v1241 = vpop.f32.mrf.mxu0
    %v1242 = vadd.f32 0.0, %v1241
    %1243 = vdwg.mxu0
    %v1245 = vsel %vm863, %v1170, 0
    %1247 = vmatpush.msra.mxu0 0.0
    %1248 = vmatpush.msra.mxu0 0.0
    %1249 = vmatpush.msra.mxu0 0.0
    %1250 = vmatpush.msra.mxu0 0.0
    %1251 = vmatpush.msra.mxu0 0.0
    %1252 = vmatpush.msra.mxu0 0.0
    %1253 = vmatpush.msra.mxu0 0.0
    %1254 = vmatpush.msra.mxu0 0.0
    %1255 = vmatpush.msra.mxu0 0.0
    %1256 = vmatpush.msra.mxu0 0.0
    %1257 = vmatpush.msra.mxu0 0.0
    %1258 = vmatpush.msra.mxu0 0.0
    %1259 = vmatpush.msra.mxu0 0.0
    %1260 = vmatpush.msra.mxu0 0.0
    %1261 = vmatpush.msra.mxu0 0.0
    %1262 = vmatpush.msra.mxu0 %v808
    %1263 = vmatmul.f32.gmra.mxu0 %v1245
    %v1264 = vpop.f32.mrf.mxu0
    %v1265 = vadd.f32 0.0, %v1264
    %1266 = vdwg.mxu0
    %v1268 = vsel %vm863, %v1171, 0
    %1270 = vmatpush.msra.mxu0 0.0
    %1271 = vmatpush.msra.mxu0 0.0
    %1272 = vmatpush.msra.mxu0 0.0
    %1273 = vmatpush.msra.mxu0 0.0
    %1274 = vmatpush.msra.mxu0 0.0
    %1275 = vmatpush.msra.mxu0 0.0
    %1276 = vmatpush.msra.mxu0 0.0
    %1277 = vmatpush.msra.mxu0 0.0
    %1278 = vmatpush.msra.mxu0 0.0
    %1279 = vmatpush.msra.mxu0 0.0
    %1280 = vmatpush.msra.mxu0 0.0
    %1281 = vmatpush.msra.mxu0 0.0
    %1282 = vmatpush.msra.mxu0 0.0
    %1283 = vmatpush.msra.mxu0 0.0
    %1284 = vmatpush.msra.mxu0 0.0
    %1285 = vmatpush.msra.mxu0 %v856
    %1286 = vmatmul.f32.gmra.mxu0 %v1268
    %v1287 = vpop.f32.mrf.mxu0
    %v1288 = vadd.f32 0.0, %v1287
    %1289 = vdwg.mxu0
    %v1291 = vsel %vm863, %v1172, 0
    %1293 = vmatpush.msra.mxu0 0.0
    %1294 = vmatpush.msra.mxu0 0.0
    %1295 = vmatpush.msra.mxu0 0.0
    %1296 = vmatpush.msra.mxu0 0.0
    %1297 = vmatpush.msra.mxu0 0.0
    %1298 = vmatpush.msra.mxu0 0.0
    %1299 = vmatpush.msra.mxu0 0.0
    %1300 = vmatpush.msra.mxu0 0.0
    %1301 = vmatpush.msra.mxu0 0.0
    %1302 = vmatpush.msra.mxu0 0.0
    %1303 = vmatpush.msra.mxu0 0.0
    %1304 = vmatpush.msra.mxu0 0.0
    %1305 = vmatpush.msra.mxu0 0.0
    %1306 = vmatpush.msra.mxu0 0.0
    %1307 = vmatpush.msra.mxu0 0.0
    %1308 = vmatpush.msra.mxu0 %v858
    %1309 = vmatmul.f32.gmra.mxu0 %v1291
    %v1310 = vpop.f32.mrf.mxu0
    %v1311 = vadd.f32 0.0, %v1310
    %1312 = vdwg.mxu0
    %v1314 = vsel %vm863, %v1173, 0
    %1316 = vmatpush.msra.mxu0 0.0
    %1317 = vmatpush.msra.mxu0 0.0
    %1318 = vmatpush.msra.mxu0 0.0
    %1319 = vmatpush.msra.mxu0 0.0
    %1320 = vmatpush.msra.mxu0 0.0
    %1321 = vmatpush.msra.mxu0 0.0
    %1322 = vmatpush.msra.mxu0 0.0
    %1323 = vmatpush.msra.mxu0 0.0
    %1324 = vmatpush.msra.mxu0 0.0
    %1325 = vmatpush.msra.mxu0 0.0
    %1326 = vmatpush.msra.mxu0 0.0
    %1327 = vmatpush.msra.mxu0 0.0
    %1328 = vmatpush.msra.mxu0 0.0
    %1329 = vmatpush.msra.mxu0 0.0
    %1330 = vmatpush.msra.mxu0 0.0
    %1331 = vmatpush.msra.mxu0 %v860
    %1332 = vmatmul.f32.gmra.mxu0 %v1314
    %v1333 = vpop.f32.mrf.mxu0
    %v1334 = vadd.f32 0.0, %v1333
    %1335 = vdwg.mxu0
    %v1337 = vsel %vm863, %v1174, 0
    %1339 = vmatpush.msra.mxu0 0.0
    %1340 = vmatpush.msra.mxu0 0.0
    %1341 = vmatpush.msra.mxu0 0.0
    %1342 = vmatpush.msra.mxu0 0.0
    %1343 = vmatpush.msra.mxu0 0.0
    %1344 = vmatpush.msra.mxu0 0.0
    %1345 = vmatpush.msra.mxu0 0.0
    %1346 = vmatpush.msra.mxu0 0.0
    %1347 = vmatpush.msra.mxu0 0.0
    %1348 = vmatpush.msra.mxu0 0.0
    %1349 = vmatpush.msra.mxu0 0.0
    %1350 = vmatpush.msra.mxu0 0.0
    %1351 = vmatpush.msra.mxu0 0.0
    %1352 = vmatpush.msra.mxu0 0.0
    %1353 = vmatpush.msra.mxu0 0.0
    %1354 = vmatpush.msra.mxu0 %v862
    %1355 = vmatmul.f32.gmra.mxu0 %v1337
    %v1356 = vpop.f32.mrf.mxu0
    %v1357 = vadd.f32 0.0, %v1356
    %1358 = vdwg.mxu0
    %v1359 = vrot.slane %v1242, 4
    %v1360 = vsel %vm155, %v1359, %v1196
    %v1361 = vrot.slane %v1196, 4
    %v1362 = vsel %vm155, %v1242, %v1361
    %v1364 = vunpack.c.l.s4 1983009808
    %v1365 = vunpack.c.0.s8 %v1364
    %v1366 = vperm.slane %v1360, %v1365
    %v1368 = vunpack.c.l.s4 1983009808
    %v1369 = vunpack.c.0.s8 %v1368
    %v1370 = vperm.slane %v1362, %v1369
    %v1371 = vrot.slane %v1265, 4
    %v1372 = vsel %vm155, %v1371, %v1219
    %v1373 = vrot.slane %v1219, 4
    %v1374 = vsel %vm155, %v1265, %v1373
    %v1376 = vunpack.c.l.s4 1983009808
    %v1377 = vunpack.c.0.s8 %v1376
    %v1378 = vperm.slane %v1372, %v1377
    %v1380 = vunpack.c.l.s4 1983009808
    %v1381 = vunpack.c.0.s8 %v1380
    %v1382 = vperm.slane %v1374, %v1381
    %v1383 = vrot.slane %v1378, 4
    %v1384 = vsel %vm155, %v1383, %v1366
    %v1385 = vrot.slane %v1366, 4
    %v1386 = vsel %vm155, %v1378, %v1385
    %v1388 = vunpack.c.l.s4 1934713408
    %v1389 = vunpack.c.0.s8 %v1388
    %v1390 = vperm.slane %v1384, %v1389
    %v1392 = vunpack.c.l.s4 1934713408
    %v1393 = vunpack.c.0.s8 %v1392
    %v1394 = vperm.slane %v1386, %v1393
    %v1395 = vrot.slane %v1382, 4
    %v1396 = vsel %vm155, %v1395, %v1370
    %v1397 = vrot.slane %v1370, 4
    %v1398 = vsel %vm155, %v1382, %v1397
    %v1400 = vunpack.c.l.s4 1934713408
    %v1401 = vunpack.c.0.s8 %v1400
    %v1402 = vperm.slane %v1396, %v1401
    %v1404 = vunpack.c.l.s4 1934713408
    %v1405 = vunpack.c.0.s8 %v1404
    %v1406 = vperm.slane %v1398, %v1405
    %v1407 = vrot.slane %v1390, 4
    %v1408 = vsel %vm155, 0.0, %v1407
    %v1409 = vrot.slane %v1394, 4
    %v1410 = vsel %vm155, 0.0, %v1409
    %v1411 = vrot.slane %v1402, 4
    %v1412 = vsel %vm155, 0.0, %v1411
    %v1413 = vrot.slane %v1406, 4
    %v1414 = vsel %vm155, 0.0, %v1413
    %v1415 = vrot.slane %v1334, 4
    %v1416 = vsel %vm155, %v1415, %v1288
    %v1417 = vrot.slane %v1288, 4
    %v1418 = vsel %vm155, %v1334, %v1417
    %v1420 = vunpack.c.l.s4 1983009808
    %v1421 = vunpack.c.0.s8 %v1420
    %v1422 = vperm.slane %v1416, %v1421
    %v1424 = vunpack.c.l.s4 1983009808
    %v1425 = vunpack.c.0.s8 %v1424
    %v1426 = vperm.slane %v1418, %v1425
    %v1427 = vrot.slane %v1357, 4
    %v1428 = vsel %vm155, %v1427, %v1311
    %v1429 = vrot.slane %v1311, 4
    %v1430 = vsel %vm155, %v1357, %v1429
    %v1432 = vunpack.c.l.s4 1983009808
    %v1433 = vunpack.c.0.s8 %v1432
    %v1434 = vperm.slane %v1428, %v1433
    %v1436 = vunpack.c.l.s4 1983009808
    %v1437 = vunpack.c.0.s8 %v1436
    %v1438 = vperm.slane %v1430, %v1437
    %v1439 = vrot.slane %v1434, 4
    %v1440 = vsel %vm155, %v1439, %v1422
    %v1441 = vrot.slane %v1422, 4
    %v1442 = vsel %vm155, %v1434, %v1441
    %v1444 = vunpack.c.l.s4 1934713408
    %v1445 = vunpack.c.0.s8 %v1444
    %v1446 = vperm.slane %v1440, %v1445
    %v1448 = vunpack.c.l.s4 1934713408
    %v1449 = vunpack.c.0.s8 %v1448
    %v1450 = vperm.slane %v1442, %v1449
    %v1451 = vrot.slane %v1438, 4
    %v1452 = vsel %vm155, %v1451, %v1426
    %v1453 = vrot.slane %v1426, 4
    %v1454 = vsel %vm155, %v1438, %v1453
    %v1456 = vunpack.c.l.s4 1934713408
    %v1457 = vunpack.c.0.s8 %v1456
    %v1458 = vperm.slane %v1452, %v1457
    %v1460 = vunpack.c.l.s4 1934713408
    %v1461 = vunpack.c.0.s8 %v1460
    %v1462 = vperm.slane %v1454, %v1461
    %v1463 = vrot.slane %v1446, 4
    %v1464 = vsel %vm155, 0.0, %v1463
    %v1465 = vrot.slane %v1450, 4
    %v1466 = vsel %vm155, 0.0, %v1465
    %v1467 = vrot.slane %v1458, 4
    %v1468 = vsel %vm155, 0.0, %v1467
    %v1469 = vrot.slane %v1462, 4
    %v1470 = vsel %vm155, 0.0, %v1469
    %v1471 = vsel %vm155, %v1409, %v1390
    %v1473 = vunpack.c.l.s4 1983009808
    %v1474 = vunpack.c.0.s8 %v1473
    %v1475 = vperm.slane %v1471, %v1474
    %v1476 = vrot.slane %v1410, 4
    %v1477 = vsel %vm155, %v1476, %v1408
    %v1479 = vunpack.c.l.s4 1983009808
    %v1480 = vunpack.c.0.s8 %v1479
    %v1481 = vperm.slane %v1477, %v1480
    %v1482 = vsel %vm155, %v1413, %v1402
    %v1484 = vunpack.c.l.s4 1983009808
    %v1485 = vunpack.c.0.s8 %v1484
    %v1486 = vperm.slane %v1482, %v1485
    %v1487 = vrot.slane %v1414, 4
    %v1488 = vsel %vm155, %v1487, %v1412
    %v1490 = vunpack.c.l.s4 1983009808
    %v1491 = vunpack.c.0.s8 %v1490
    %v1492 = vperm.slane %v1488, %v1491
    %v1493 = vrot.slane %v1481, 4
    %v1494 = vsel %vm155, %v1493, %v1475
    %v1495 = vrot.slane %v1475, 4
    %v1496 = vsel %vm155, %v1481, %v1495
    %v1498 = vunpack.c.l.s4 1934713408
    %v1499 = vunpack.c.0.s8 %v1498
    %v1500 = vperm.slane %v1494, %v1499
    %v1502 = vunpack.c.l.s4 1934713408
    %v1503 = vunpack.c.0.s8 %v1502
    %v1504 = vperm.slane %v1496, %v1503
    %v1505 = vrot.slane %v1492, 4
    %v1506 = vsel %vm155, %v1505, %v1486
    %v1507 = vrot.slane %v1486, 4
    %v1508 = vsel %vm155, %v1492, %v1507
    %v1510 = vunpack.c.l.s4 1934713408
    %v1511 = vunpack.c.0.s8 %v1510
    %v1512 = vperm.slane %v1506, %v1511
    %v1514 = vunpack.c.l.s4 1934713408
    %v1515 = vunpack.c.0.s8 %v1514
    %v1516 = vperm.slane %v1508, %v1515
    %v1517 = vrot.slane %v1512, 4
    %v1518 = vsel %vm155, %v1517, %v1500
    %v1519 = vrot.slane %v1500, 4
    %v1520 = vsel %vm155, %v1512, %v1519
    %v1521 = vrot.slane %v1516, 4
    %v1522 = vsel %vm155, %v1521, %v1504
    %v1523 = vrot.slane %v1504, 4
    %v1524 = vsel %vm155, %v1516, %v1523
    %v1525 = vsel %vm155, %v1465, %v1446
    %v1527 = vunpack.c.l.s4 1983009808
    %v1528 = vunpack.c.0.s8 %v1527
    %v1529 = vperm.slane %v1525, %v1528
    %v1530 = vrot.slane %v1466, 4
    %v1531 = vsel %vm155, %v1530, %v1464
    %v1533 = vunpack.c.l.s4 1983009808
    %v1534 = vunpack.c.0.s8 %v1533
    %v1535 = vperm.slane %v1531, %v1534
    %v1536 = vsel %vm155, %v1469, %v1458
    %v1538 = vunpack.c.l.s4 1983009808
    %v1539 = vunpack.c.0.s8 %v1538
    %v1540 = vperm.slane %v1536, %v1539
    %v1541 = vrot.slane %v1470, 4
    %v1542 = vsel %vm155, %v1541, %v1468
    %v1544 = vunpack.c.l.s4 1983009808
    %v1545 = vunpack.c.0.s8 %v1544
    %v1546 = vperm.slane %v1542, %v1545
    %v1547 = vrot.slane %v1535, 4
    %v1548 = vsel %vm155, %v1547, %v1529
    %v1549 = vrot.slane %v1529, 4
    %v1550 = vsel %vm155, %v1535, %v1549
    %v1552 = vunpack.c.l.s4 1934713408
    %v1553 = vunpack.c.0.s8 %v1552
    %v1554 = vperm.slane %v1548, %v1553
    %v1556 = vunpack.c.l.s4 1934713408
    %v1557 = vunpack.c.0.s8 %v1556
    %v1558 = vperm.slane %v1550, %v1557
    %v1559 = vrot.slane %v1546, 4
    %v1560 = vsel %vm155, %v1559, %v1540
    %v1561 = vrot.slane %v1540, 4
    %v1562 = vsel %vm155, %v1546, %v1561
    %v1564 = vunpack.c.l.s4 1934713408
    %v1565 = vunpack.c.0.s8 %v1564
    %v1566 = vperm.slane %v1560, %v1565
    %v1568 = vunpack.c.l.s4 1934713408
    %v1569 = vunpack.c.0.s8 %v1568
    %v1570 = vperm.slane %v1562, %v1569
    %v1571 = vrot.slane %v1566, 4
    %v1572 = vsel %vm155, %v1571, %v1554
    %v1573 = vrot.slane %v1554, 4
    %v1574 = vsel %vm155, %v1566, %v1573
    %v1575 = vrot.slane %v1570, 4
    %v1576 = vsel %vm155, %v1575, %v1558
    %v1577 = vrot.slane %v1558, 4
    %v1578 = vsel %vm155, %v1570, %v1577
    %1581 = vrot.lane.b32.xlu0 %v1520, 8
    %v1582 = vpop.permute.xlu0 %1581
    %1583 = vrot.lane.b32.xlu0 %v1574, 8
    %v1584 = vpop.permute.xlu0 %1583
    %1589 = vrot.lane.b32.xlu0 %v1522, 16
    %v1590 = vpop.permute.xlu0 %1589
    %1591 = vrot.lane.b32.xlu0 %v1576, 16
    %v1592 = vpop.permute.xlu0 %1591
    %1597 = vrot.lane.b32.xlu0 %v1524, 24
    %v1598 = vpop.permute.xlu0 %1597
    %1599 = vrot.lane.b32.xlu0 %v1578, 24
    %v1600 = vpop.permute.xlu0 %1599
    %v1603 = vsel %vm863, %v1518, %v1582
    %v1604 = vsel %vm863, %v1572, %v1584
    %vm1605 = vcmask 130048
    %v1606 = vsel %vm1605, %v1603, %v1590
    %v1607 = vsel %vm1605, %v1604, %v1592
    %vm1608 = vcmask 195584
    %v1609 = vsel %vm1608, %v1606, %v1598
    %v1610 = vsel %vm1608, %v1607, %v1600
    %v1611 = vld [vmem:[#allocation5] sm:$0xff]
    %v1612 = vld [vmem:[#allocation5 + $0x8] sm:$0xff]
    %v1613 = vld [vmem:[#allocation5 + $0x10] sm:$0xff]
    %v1614 = vld [vmem:[#allocation5 + $0x18] sm:$0xff]
    %v1615 = vld [vmem:[#allocation8] sm:$0x1]
    %v1616 = vperm.slane %v1615, 0
    %v1618 = vsel %vm104, %v1609, 0
    %v1621 = vsel %vm104, %v1610, 0
    %1623 = vmatpush.msra.mxu0 0.0
    %1624 = vmatpush.msra.mxu0 0.0
    %1625 = vmatpush.msra.mxu0 0.0
    %1626 = vmatpush.msra.mxu0 0.0
    %1627 = vmatpush.msra.mxu0 0.0
    %1628 = vmatpush.msra.mxu0 0.0
    %1629 = vmatpush.msra.mxu0 0.0
    %1630 = vmatpush.msra.mxu0 0.0
    %1631 = vmatpush.msra.mxu0 0.0
    %1632 = vmatpush.msra.mxu0 0.0
    %1633 = vmatpush.msra.mxu0 0.0
    %1634 = vmatpush.msra.mxu0 0.0
    %1635 = vmatpush.msra.mxu0 %v1614
    %1636 = vmatpush.msra.mxu0 %v1613
    %1637 = vmatpush.msra.mxu0 %v1612
    %1638 = vmatpush.msra.mxu0 %v1611
    %1639 = vmatmul.f32.gmra.mxu0 %v1618
    %v1640 = vpop.f32.mrf.mxu0
    %v1641 = vadd.f32 %v1616, %v1640
    %1642 = vmatmul.f32.gmra.mxu0 %v1621
    %v1643 = vpop.f32.mrf.mxu0
    %v1644 = vadd.f32 %v1616, %v1643
    %1645 = vdwg.mxu0
    %v1646 = vadd.f32 %v94, %v1641
    %v1647 = vadd.f32 %v95, %v1644
    %v1648 = vld [vmem:[#allocation8 + $0x1] sm:$0x1]
    %v1649 = vld [vmem:[#allocation8 + $0x2] sm:$0x1]
    %v1650 = vsel %vm104, %v1646, 0.0
    %1651 = vadd.xlane.f32.xlu0 %v1650
    %v1652 = vpop.xlane.xlu0 %1651
    %v1653 = vsel %vm104, %v1647, 0.0
    %1654 = vadd.xlane.f32.xlu0 %v1653
    %v1655 = vpop.xlane.xlu0 %1654
    %v1656 = vrcp.pop 32.0
    %v1657 = vmul.f32 32.0, %v1656
    %v1658 = vsub.f32 1.0, %v1657
    %v1659 = vmul.f32 %v1656, %v1658
    %v1660 = vadd.f32 %v1656, %v1659
    %vm1661 = vweird.f32 %v1656
    %v1662 = vsel %vm1661, %v1656, %v1660
    %v1663 = vmul.f32 %v1652, %v1662
    %v1664 = vmul.f32 %v1655, %v1662
    %v1665 = vsub.f32 %v1646, %v1663
    %v1666 = vsub.f32 %v1647, %v1664
    %v1667 = vmul.f32 %v1665, %v1665
    %v1668 = vmul.f32 %v1666, %v1666
    %v1669 = vsel %vm104, %v1667, 0.0
    %1670 = vadd.xlane.f32.xlu0 %v1669
    %v1671 = vpop.xlane.xlu0 %1670
    %v1672 = vsel %vm104, %v1668, 0.0
    %1673 = vadd.xlane.f32.xlu0 %v1672
    %v1674 = vpop.xlane.xlu0 %1673
    %v1675 = vmul.f32 %v1671, %v1662
    %v1676 = vmul.f32 %v1674, %v1662
    %v1677 = vadd.f32 %v1675, 1e-05
    %v1678 = vadd.f32 %v1676, 1e-05
    %v1679 = vrsqrt.pop %v1677
    %v1680 = vmul.f32 %v1679, %v1677
    %v1681 = vmul.f32 %v1680, %v1679
    %v1682 = vmul.f32 0.5, %v1681
    %v1683 = vsub.f32 1.5, %v1682
    %v1684 = vmul.f32 %v1679, %v1683
    %vm1685 = vweird.f32 %v1677
    %vm1686 = vweird.f32 %v1679
    %vm1687 = vmor %vm1685, %vm1686
    %v1688 = vsel %vm1687, %v1679, %v1684
    %v1689 = vrsqrt.pop %v1678
    %v1690 = vmul.f32 %v1689, %v1678
    %v1691 = vmul.f32 %v1690, %v1689
    %v1692 = vmul.f32 0.5, %v1691
    %v1693 = vsub.f32 1.5, %v1692
    %v1694 = vmul.f32 %v1689, %v1693
    %vm1695 = vweird.f32 %v1678
    %vm1696 = vweird.f32 %v1689
    %vm1697 = vmor %vm1695, %vm1696
    %v1698 = vsel %vm1697, %v1689, %v1694
    %v1699 = vmul.f32 %v1665, %v1688
    %v1700 = vmul.f32 %v1666, %v1698
    %v1701 = vperm.slane %v1648, 0
    %v1702 = vmul.f32 %v1699, %v1701
    %v1703 = vmul.f32 %v1700, %v1701
    %v1704 = vperm.slane %v1649, 0
    %v1705 = vadd.f32 %v1702, %v1704
    %v1706 = vadd.f32 %v1703, %v1704
    %v1707 = vld [vmem:[#allocation7] sm:$0xff]
    %v1708 = vld [vmem:[#allocation7 + $0x8] sm:$0xff]
    %v1709 = vld [vmem:[#allocation7 + $0x10] sm:$0xff]
    %v1710 = vld [vmem:[#allocation7 + $0x18] sm:$0xff]
    %v1711 = vld [vmem:[%s8] sm:$0x1]
    %v1712 = vperm.slane %v1711, 0
    %v1714 = vsel %vm104, %v1705, 0
    %v1717 = vsel %vm104, %v1706, 0
    %1719 = vmatpush.msra.mxu0 0.0
    %1720 = vmatpush.msra.mxu0 0.0
    %1721 = vmatpush.msra.mxu0 0.0
    %1722 = vmatpush.msra.mxu0 0.0
    %1723 = vmatpush.msra.mxu0 0.0
    %1724 = vmatpush.msra.mxu0 0.0
    %1725 = vmatpush.msra.mxu0 0.0
    %1726 = vmatpush.msra.mxu0 0.0
    %1727 = vmatpush.msra.mxu0 0.0
    %1728 = vmatpush.msra.mxu0 0.0
    %1729 = vmatpush.msra.mxu0 0.0
    %1730 = vmatpush.msra.mxu0 0.0
    %1731 = vmatpush.msra.mxu0 %v1710
    %1732 = vmatpush.msra.mxu0 %v1709
    %1733 = vmatpush.msra.mxu0 %v1708
    %1734 = vmatpush.msra.mxu0 %v1707
    %1735 = vmatmul.f32.gmra.mxu0 %v1714
    %v1736 = vpop.f32.mrf.mxu0
    %v1737 = vadd.f32 %v1712, %v1736
    %1738 = vmatmul.f32.gmra.mxu0 %v1717
    %v1739 = vpop.f32.mrf.mxu0
    %v1740 = vadd.f32 %v1712, %v1739
    %1741 = vdwg.mxu0
    %v1742 = vmul.f32 %v1737, %v1737
    %v1743 = vmul.f32 %v1740, %v1740
    %v1744 = vmul.f32 %v1737, %v1742
    %v1745 = vmul.f32 %v1740, %v1743
    %v1746 = vmul.f32 %v1744, 0.044715
    %v1747 = vmul.f32 %v1745, 0.044715
    %v1748 = vadd.f32 %v1737, %v1746
    %v1749 = vadd.f32 %v1740, %v1747
    %v1750 = vmul.f32 %v1748, 0.7978846
    %v1751 = vmul.f32 %v1749, 0.7978846
    %v1752 = vtanh.pop %v1750
    %v1753 = vtanh.pop %v1751
    %v1754 = vadd.f32 %v1752, 1.0
    %v1755 = vadd.f32 %v1753, 1.0
    %v1756 = vmul.f32 %v1754, 0.5
    %v1757 = vmul.f32 %v1755, 0.5
    %v1758 = vmul.f32 %v1737, %v1756
    %v1759 = vmul.f32 %v1740, %v1757
    %v1760 = vld [vmem:[%s5] sm:$0xff]
    %v1761 = vld [vmem:[%s5 + $0x8] sm:$0xff]
    %v1762 = vld [vmem:[%s5 + $0x10] sm:$0xff]
    %v1763 = vld [vmem:[%s5 + $0x18] sm:$0xff]
    %v1764 = vld [vmem:[%s5 + $0x20] sm:$0xff]
    %v1765 = vld [vmem:[%s5 + $0x28] sm:$0xff]
    %v1766 = vld [vmem:[%s5 + $0x30] sm:$0xff]
    %v1767 = vld [vmem:[%s5 + $0x38] sm:$0xff]
    %v1768 = vld [vmem:[%s8 + $0x1] sm:$0x1]
    %v1769 = vperm.slane %v1768, 0
    %vm1770 = vcmask 523264
    %v1772 = vsel %vm1770, %v1758, 0
    %v1775 = vsel %vm1770, %v1759, 0
    %1777 = vmatpush.msra.mxu0 0.0
    %1778 = vmatpush.msra.mxu0 0.0
    %1779 = vmatpush.msra.mxu0 0.0
    %1780 = vmatpush.msra.mxu0 0.0
    %1781 = vmatpush.msra.mxu0 0.0
    %1782 = vmatpush.msra.mxu0 0.0
    %1783 = vmatpush.msra.mxu0 0.0
    %1784 = vmatpush.msra.mxu0 0.0
    %1785 = vmatpush.msra.mxu0 %v1767
    %1786 = vmatpush.msra.mxu0 %v1766
    %1787 = vmatpush.msra.mxu0 %v1765
    %1788 = vmatpush.msra.mxu0 %v1764
    %1789 = vmatpush.msra.mxu0 %v1763
    %1790 = vmatpush.msra.mxu0 %v1762
    %1791 = vmatpush.msra.mxu0 %v1761
    %1792 = vmatpush.msra.mxu0 %v1760
    %1793 = vmatmul.f32.gmra.mxu0 %v1772
    %v1794 = vpop.f32.mrf.mxu0
    %v1795 = vadd.f32 %v1769, %v1794
    %1796 = vmatmul.f32.gmra.mxu0 %v1775
    %v1797 = vpop.f32.mrf.mxu0
    %v1798 = vadd.f32 %v1769, %v1797
    %1799 = vdwg.mxu0
    %v1800 = vmul.f32 %v1795, %v1795
    %v1801 = vmul.f32 %v1798, %v1798
    %v1802 = vmul.f32 %v1795, %v1800
    %v1803 = vmul.f32 %v1798, %v1801
    %v1804 = vmul.f32 %v1802, 0.044715
    %v1805 = vmul.f32 %v1803, 0.044715
    %v1806 = vadd.f32 %v1795, %v1804
    %v1807 = vadd.f32 %v1798, %v1805
    %v1808 = vmul.f32 %v1806, 0.7978846
    %v1809 = vmul.f32 %v1807, 0.7978846
    %v1810 = vtanh.pop %v1808
    %v1811 = vtanh.pop %v1809
    %v1812 = vadd.f32 %v1810, 1.0
    %v1813 = vadd.f32 %v1811, 1.0
    %v1814 = vmul.f32 %v1812, 0.5
    %v1815 = vmul.f32 %v1813, 0.5
    %v1816 = vmul.f32 %v1795, %v1814
    %v1817 = vmul.f32 %v1798, %v1815
    %v1818 = vld [vmem:[%s6] sm:$0xff]
    %v1819 = vld [vmem:[%s6 + $0x8] sm:$0xff]
    %v1820 = vld [vmem:[%s6 + $0x10] sm:$0xff]
    %v1821 = vld [vmem:[%s6 + $0x18] sm:$0xff]
    %v1822 = vld [vmem:[%s6 + $0x20] sm:$0xff]
    %v1823 = vld [vmem:[%s6 + $0x28] sm:$0xff]
    %v1824 = vld [vmem:[%s6 + $0x30] sm:$0xff]
    %v1825 = vld [vmem:[%s6 + $0x38] sm:$0xff]
    %v1826 = vld [vmem:[#allocation8 + $0x3] sm:$0x1]
    %v1827 = vperm.slane %v1826, 0
    %v1829 = vsel %vm1770, %v1816, 0
    %v1832 = vsel %vm1770, %v1817, 0
    %1834 = vmatpush.msra.mxu0 0.0
    %1835 = vmatpush.msra.mxu0 0.0
    %1836 = vmatpush.msra.mxu0 0.0
    %1837 = vmatpush.msra.mxu0 0.0
    %1838 = vmatpush.msra.mxu0 0.0
    %1839 = vmatpush.msra.mxu0 0.0
    %1840 = vmatpush.msra.mxu0 0.0
    %1841 = vmatpush.msra.mxu0 0.0
    %1842 = vmatpush.msra.mxu0 %v1825
    %1843 = vmatpush.msra.mxu0 %v1824
    %1844 = vmatpush.msra.mxu0 %v1823
    %1845 = vmatpush.msra.mxu0 %v1822
    %1846 = vmatpush.msra.mxu0 %v1821
    %1847 = vmatpush.msra.mxu0 %v1820
    %1848 = vmatpush.msra.mxu0 %v1819
    %1849 = vmatpush.msra.mxu0 %v1818
    %1850 = vmatmul.f32.gmra.mxu0 %v1829
    %v1851 = vpop.f32.mrf.mxu0
    %v1852 = vadd.f32 %v1827, %v1851
    %1853 = vmatmul.f32.gmra.mxu0 %v1832
    %v1854 = vpop.f32.mrf.mxu0
    %v1855 = vadd.f32 %v1827, %v1854
    %1856 = vdwg.mxu0
    %v1857 = vadd.f32 %v1705, %v1852
    %v1858 = vadd.f32 %v1706, %v1855
    %v1859 = vld [vmem:[#allocation8 + $0x4] sm:$0x1]
    %v1860 = vld [vmem:[#allocation8 + $0x5] sm:$0x1]
    %v1861 = vsel %vm104, %v1857, 0.0
    %1862 = vadd.xlane.f32.xlu0 %v1861
    %v1863 = vpop.xlane.xlu0 %1862
    %v1864 = vsel %vm104, %v1858, 0.0
    %1865 = vadd.xlane.f32.xlu0 %v1864
    %v1866 = vpop.xlane.xlu0 %1865
    %v1867 = vmul.f32 %v1863, %v1662
    %v1868 = vmul.f32 %v1866, %v1662
    %v1869 = vsub.f32 %v1857, %v1867
    %v1870 = vsub.f32 %v1858, %v1868
    %v1871 = vmul.f32 %v1869, %v1869
    %v1872 = vmul.f32 %v1870, %v1870
    %v1873 = vsel %vm104, %v1871, 0.0
    %1874 = vadd.xlane.f32.xlu0 %v1873
    %v1875 = vpop.xlane.xlu0 %1874
    %v1876 = vsel %vm104, %v1872, 0.0
    %1877 = vadd.xlane.f32.xlu0 %v1876
    %v1878 = vpop.xlane.xlu0 %1877
    %v1879 = vmul.f32 %v1875, %v1662
    %v1880 = vmul.f32 %v1878, %v1662
    %v1881 = vadd.f32 %v1879, 1e-05
    %v1882 = vadd.f32 %v1880, 1e-05
    %v1883 = vrsqrt.pop %v1881
    %v1884 = vmul.f32 %v1883, %v1881
    %v1885 = vmul.f32 %v1884, %v1883
    %v1886 = vmul.f32 0.5, %v1885
    %v1887 = vsub.f32 1.5, %v1886
    %v1888 = vmul.f32 %v1883, %v1887
    %vm1889 = vweird.f32 %v1881
    %vm1890 = vweird.f32 %v1883
    %vm1891 = vmor %vm1889, %vm1890
    %v1892 = vsel %vm1891, %v1883, %v1888
    %v1893 = vrsqrt.pop %v1882
    %v1894 = vmul.f32 %v1893, %v1882
    %v1895 = vmul.f32 %v1894, %v1893
    %v1896 = vmul.f32 0.5, %v1895
    %v1897 = vsub.f32 1.5, %v1896
    %v1898 = vmul.f32 %v1893, %v1897
    %vm1899 = vweird.f32 %v1882
    %vm1900 = vweird.f32 %v1893
    %vm1901 = vmor %vm1899, %vm1900
    %v1902 = vsel %vm1901, %v1893, %v1898
    %v1903 = vmul.f32 %v1869, %v1892
    %v1904 = vmul.f32 %v1870, %v1902
    %v1905 = vperm.slane %v1859, 0
    %v1906 = vmul.f32 %v1903, %v1905
    %v1907 = vmul.f32 %v1904, %v1905
    %v1908 = vperm.slane %v1860, 0
    %v1909 = vadd.f32 %v1906, %v1908
    %v1910 = vadd.f32 %v1907, %v1908
    %1911 = vst.msk [vmem:[#allocation10] sm:$0xff] %vm104, %v1909
    %1912 = vst.msk [vmem:[#allocation10 + $0x8] sm:$0xff] %vm104, %v1910
    // Predicated region
    $region54: #{tpu_custom_call.1} parent=1 // pred_check
      _
    $region55: #{tpu_custom_call.1} parent=1 // pred_check_branch
      %1914 = sbr.rel (0) target = $region57
    $region56: #{tpu_custom_call.1} parent=1 // pred_region
      %1916 = vsyncadd [#allocation4], 0
      %s1917 = sshll.u32 [#allocation10], 4
      %s1918 = int_to_ptr.vmem [resolvable:$true] %s1917
      %s1919 = sshll.u32 %s9, 4
      %s1920 = int_to_ptr.hbm [resolvable:$true] %s1919
      %1925 = dma.vmem_to_hbm [thread:$0]  %s1918, 256, %s1920, [#allocation4], 128, 128, 8
    $region57: #{tpu_custom_call.1} parent=1 // pred_fallthru
      _
    // Predicated region
    $region58: #{tpu_custom_call.1} parent=1 // pred_check
      _
    $region59: #{tpu_custom_call.1} parent=1 // pred_check_branch
      %1927 = sbr.rel (0) target = $region61
    $region60: #{tpu_custom_call.1} parent=1 // pred_region
      %1929 = dma.done [#allocation4], 256
    $region61: #{tpu_custom_call.1} parent=1 // pred_fallthru
      _
    %1930 = vsyncpa [#allocation3], 1
    %1931 = vsyncpa [#allocation6], 1
    %1932 = vsyncpa [#allocation9], 1
    %1933 = vsyncpa [#allocation4], 1

</llo_original>
